<compile_context>
chip_gen: v5e
topology: v5e:2x2
jax: 0.10.0
libtpu: 0.0.40
codegen_flags: <defaults>
</compile_context>

<pallas_src>
import jax
import jax.numpy as jnp
from jax.experimental import pallas as pl
from jax.experimental.pallas import tpu as pltpu

LANE = 128  # lane padding for layers 2-4 and the output (lane-dense vst)


def mlp_kernel(x_ref, w1_ref, w2_ref, w3_ref, w4_ref, b_ref, o_ref):
    # x_ref: (tm, 3072) f32; w1: (3072, H1) bf16 (unpadded);
    # w2: (H1, 128), w3/w4: (128, 128) bf16; b_ref: (4, 128) f32 packed.
    h1 = w1_ref.shape[1]                      # static at trace time
    b = b_ref[...]                            # f32

    # Layer 1: cast x in-vreg, (tm, 3072) @ (3072, H1), f32 accumulate.
    x = x_ref[...].astype(jnp.bfloat16)
    h = jnp.dot(x, w1_ref[...], preferred_element_type=jnp.float32)
    h = jnp.maximum(h + b[0:1, 0:h1], 0.0)

    # Layer 2: (tm, H1) @ (H1, 128)
    h = jnp.dot(h.astype(jnp.bfloat16), w2_ref[...],
                preferred_element_type=jnp.float32)
    h = jnp.maximum(h + b[1:2, :], 0.0)

    # Layer 3: (tm, 128) @ (128, 128)
    h = jnp.dot(h.astype(jnp.bfloat16), w3_ref[...],
                preferred_element_type=jnp.float32)
    h = jnp.maximum(h + b[2:3, :], 0.0)

    # Layer 4 (logits padded to 128 lanes): (tm, 128) @ (128, 128)
    out = jnp.dot(h.astype(jnp.bfloat16), w4_ref[...],
                  preferred_element_type=jnp.float32)
    o_ref[...] = (out + b[3:4, :]).astype(o_ref.dtype)


def _pad_to(a, shape):
    pads = [(0, t - s) for s, t in zip(a.shape, shape)]
    return jnp.pad(a, pads)


def prepare_params(params):
    """One-time pad/cast of weights (do NOT call per forward)."""
    w1, b1, w2, b2, w3, b3, w4, b4 = params
    k, h1 = w1.shape
    w1p = w1.astype(jnp.bfloat16)                           # (3072, H1) unpadded
    w2p = _pad_to(w2, (h1, LANE)).astype(jnp.bfloat16)      # (H1, 128)
    w3p = _pad_to(w3, (LANE, LANE)).astype(jnp.bfloat16)    # (128, 128)
    w4p = _pad_to(w4, (LANE, LANE)).astype(jnp.bfloat16)    # (128, 128)
    b_pack = jnp.stack([
        _pad_to(b1.reshape(-1), (LANE,)),
        _pad_to(b2.reshape(-1), (LANE,)),
        _pad_to(b3.reshape(-1), (LANE,)),
        _pad_to(b4.reshape(-1), (LANE,)),
    ], axis=0).astype(jnp.float32)                          # (4, 128), one DMA
    n_classes = int(w4.shape[1])
    return (w1p, w2p, w3p, w4p, b_pack, n_classes)


def _choose_tiling(B):
    """Return (tm, Bp): tm divides Bp, Bp == B whenever possible (no x pad)."""
    if B <= 512:
        # Prefer >=2 tiles (v7x dual-TC + DMA overlap); tm multiple of 8.
        tm = (B // 2) - ((B // 2) % 8)
        while tm >= 8:
            if B % tm == 0:
                return tm, B
            tm -= 8
        return B, B  # single full-size tile; (8,128) rule waived (block == array)
    tm = 512        # cap: ~13 MB/step with f32 x, fits v5e/v6e/v7x scoped VMEM
    while tm >= 8:
        if B % tm == 0:
            return tm, B
        tm -= 8
    # Rare fallback (B > 512 with no multiple-of-8 divisor): pad the batch.
    tm = 256
    return tm, ((B + tm - 1) // tm) * tm


def base_model_forward(x_img, prepared):
    """x_img: (B, 3, 32, 32) float32 NCHW.  Returns (B, n_classes) f32 logits."""
    w1p, w2p, w3p, w4p, b_pack, n_classes = prepared
    B = x_img.shape[0]
    x = x_img.reshape(B, -1)            # == torch .view(-1, 32*32*3); stays f32
    K = x.shape[1]
    H1 = w1p.shape[1]

    tm, Bp = _choose_tiling(B)
    if Bp != B:                         # rare fallback only
        x = jnp.pad(x, ((0, Bp - B), (0, 0)))
    nb = Bp // tm

    # Advisory cost estimate (matmul flops + HBM traffic: f32 x, bf16 weights).
    flops = 2 * Bp * (K * H1 + H1 * LANE + 2 * LANE * LANE)
    bytes_accessed = (x.size * 4
                      + 2 * (w1p.size + w2p.size + w3p.size + w4p.size)
                      + b_pack.size * 4 + Bp * LANE * 4)

    const = lambda i: (0, 0)  # weights/biases stay VMEM-resident across steps

    out_padded = pl.pallas_call(
        mlp_kernel,
        out_shape=jax.ShapeDtypeStruct((Bp, LANE), jnp.float32),
        grid_spec=pltpu.PrefetchScalarGridSpec(
            num_scalar_prefetch=0,
            grid=(nb,),
            in_specs=[
                pl.BlockSpec((tm, K), lambda i: (i, 0)),   # x (batch-tiled, f32)
                pl.BlockSpec((K, H1), const),              # w1 (unpadded bf16)
                pl.BlockSpec((H1, LANE), const),           # w2
                pl.BlockSpec((LANE, LANE), const),         # w3
                pl.BlockSpec((LANE, LANE), const),         # w4
                pl.BlockSpec((4, LANE), const),            # packed biases
            ],
            out_specs=pl.BlockSpec((tm, LANE), lambda i: (i, 0)),
        ),
        compiler_params=pltpu.CompilerParams(
            dimension_semantics=("parallel",)),            # v7x dual-TC sharding
        cost_estimate=pl.CostEstimate(flops=flops, transcendentals=0,
                                      bytes_accessed=bytes_accessed),
    )(x, w1p, w2p, w3p, w4p, b_pack)

    return out_padded[:B, :n_classes]


def init_params(key, input_sz, hidden_dim, n_classes):
    """Deterministic synthetic init (uniform, PyTorch-Linear-like bounds)."""
    dims = [input_sz, hidden_dim * 2, hidden_dim, hidden_dim // 2, n_classes]
    params = []
    for i in range(4):
        key, kw, kb = jax.random.split(key, 3)
        fan_in, fan_out = dims[i], dims[i + 1]
        bound = 1.0 / jnp.sqrt(fan_in)
        w = jax.random.uniform(kw, (fan_in, fan_out), jnp.float32,
                               -bound, bound)
        b = jax.random.uniform(kb, (1, fan_out), jnp.float32, -bound, bound)
        params += [w, b]
    return tuple(params)


def reference_forward(x_img, params):
    """Pure f32 JAX reference matching the PyTorch module."""
    x = x_img.reshape(x_img.shape[0], -1)
    w1, b1, w2, b2, w3, b3, w4, b4 = params
    h = jnp.maximum(x @ w1 + b1, 0.0)
    h = jnp.maximum(h @ w2 + b2, 0.0)
    h = jnp.maximum(h @ w3 + b3, 0.0)
    return h @ w4 + b4


if __name__ == "__main__":
    # Forward implies input_sz = 32*32*3 = 3072 (hard-coded view in PyTorch).
    INPUT_SZ, HIDDEN_DIM, N_CLASSES, BATCH = 32 * 32 * 3, 32, 10, 8

    key = jax.random.PRNGKey(0)
    key, kx = jax.random.split(key)
    x_img = jax.random.normal(kx, (BATCH, 3, 32, 32), jnp.float32)  # NCHW
    params = init_params(key, INPUT_SZ, HIDDEN_DIM, N_CLASSES)

    prepared = prepare_params(params)   # one-time pad/cast of weights
    out = jax.block_until_ready(base_model_forward(x_img, prepared))
    ref = jax.block_until_ready(reference_forward(x_img, params))

    assert out.shape == (BATCH, N_CLASSES)
    # Matmul operands are bf16 (f32 accumulate), so tolerance is loosened vs
    # the f32 reference.
    assert jnp.allclose(out, ref, atol=2e-2, rtol=2e-2), (
        float(jnp.max(jnp.abs(out - ref))))
    print("KERNEL_OK")
</pallas_src>

<mosaic_0001>
module attributes {stable_mosaic.version = 11 : i64} {
  func.func @mlp_kernel(%arg0: i32, %arg1: memref<8x3072xf32, #tpu.memory_space<vmem>>, %arg2: memref<3072x64xbf16, #tpu.memory_space<vmem>>, %arg3: memref<64x128xbf16, #tpu.memory_space<vmem>>, %arg4: memref<128x128xbf16, #tpu.memory_space<vmem>>, %arg5: memref<128x128xbf16, #tpu.memory_space<vmem>>, %arg6: memref<4x128xf32, #tpu.memory_space<vmem>>, %arg7: memref<8x128xf32, #tpu.memory_space<vmem>>) attributes {dimension_semantics = [#tpu.dimension_semantics<parallel>], iteration_bounds = array<i64: 1>, scalar_prefetch = 0 : i64, scratch_operands = 0 : i64, tpu.core_type = #tpu.core_type<tc>, window_params = [{transform_indices = @transform_0, window_bounds = array<i64: 8, 3072>}, {pipeline_mode = #tpu.pipeline_mode<synchronous>, transform_indices = @transform_1, window_bounds = array<i64: 3072, 64>}, {pipeline_mode = #tpu.pipeline_mode<synchronous>, transform_indices = @transform_2, window_bounds = array<i64: 64, 128>}, {pipeline_mode = #tpu.pipeline_mode<synchronous>, transform_indices = @transform_3, window_bounds = array<i64: 128, 128>}, {pipeline_mode = #tpu.pipeline_mode<synchronous>, transform_indices = @transform_4, window_bounds = array<i64: 128, 128>}, {pipeline_mode = #tpu.pipeline_mode<synchronous>, transform_indices = @transform_5, window_bounds = array<i64: 4, 128>}, {transform_indices = @transform_6, window_bounds = array<i64: 8, 128>}]} {
    %c0 = arith.constant 0 : index
    %c0_0 = arith.constant 0 : index
    %0 = vector.load %arg6[%c0, %c0_0] : memref<4x128xf32, #tpu.memory_space<vmem>>, vector<4x128xf32>
    %c0_1 = arith.constant 0 : index
    %c0_2 = arith.constant 0 : index
    %1 = vector.load %arg1[%c0_1, %c0_2] : memref<8x3072xf32, #tpu.memory_space<vmem>>, vector<8x3072xf32>
    %2 = arith.truncf %1 : vector<8x3072xf32> to vector<8x3072xbf16>
    %c0_3 = arith.constant 0 : index
    %c0_4 = arith.constant 0 : index
    %3 = vector.load %arg2[%c0_3, %c0_4] : memref<3072x64xbf16, #tpu.memory_space<vmem>>, vector<3072x64xbf16>
    %cst = arith.constant dense<0.000000e+00> : vector<8x64xf32>
    %4 = tpu.matmul %2, %3, %cst {dimension_numbers = #tpu.dot_dimension_numbers<[1], [0], [0], [1], [0, 0, 1, 1], [], []>} : vector<8x3072xbf16>, vector<3072x64xbf16>, vector<8x64xf32> -> vector<8x64xf32>
    %5 = vector.extract_strided_slice %0 {offsets = [0, 0], sizes = [1, 64], strides = [1, 1]} : vector<4x128xf32> to vector<1x64xf32>
    %6 = vector.broadcast %5 : vector<1x64xf32> to vector<8x64xf32>
    %7 = arith.addf %4, %6 : vector<8x64xf32>
    %cst_5 = arith.constant 0.000000e+00 : f32
    %8 = vector.broadcast %cst_5 : f32 to vector<8x64xf32>
    %9 = arith.maximumf %7, %8 : vector<8x64xf32>
    %10 = arith.truncf %9 : vector<8x64xf32> to vector<8x64xbf16>
    %c0_6 = arith.constant 0 : index
    %c0_7 = arith.constant 0 : index
    %11 = vector.load %arg3[%c0_6, %c0_7] : memref<64x128xbf16, #tpu.memory_space<vmem>>, vector<64x128xbf16>
    %cst_8 = arith.constant dense<0.000000e+00> : vector<8x128xf32>
    %12 = tpu.matmul %10, %11, %cst_8 {dimension_numbers = #tpu.dot_dimension_numbers<[1], [0], [0], [1], [0, 0, 1, 1], [], []>} : vector<8x64xbf16>, vector<64x128xbf16>, vector<8x128xf32> -> vector<8x128xf32>
    %13 = vector.extract_strided_slice %0 {offsets = [1, 0], sizes = [1, 128], strides = [1, 1]} : vector<4x128xf32> to vector<1x128xf32>
    %14 = vector.broadcast %13 : vector<1x128xf32> to vector<8x128xf32>
    %15 = arith.addf %12, %14 : vector<8x128xf32>
    %cst_9 = arith.constant 0.000000e+00 : f32
    %16 = vector.broadcast %cst_9 : f32 to vector<8x128xf32>
    %17 = arith.maximumf %15, %16 : vector<8x128xf32>
    %18 = arith.truncf %17 : vector<8x128xf32> to vector<8x128xbf16>
    %c0_10 = arith.constant 0 : index
    %c0_11 = arith.constant 0 : index
    %19 = vector.load %arg4[%c0_10, %c0_11] : memref<128x128xbf16, #tpu.memory_space<vmem>>, vector<128x128xbf16>
    %cst_12 = arith.constant dense<0.000000e+00> : vector<8x128xf32>
    %20 = tpu.matmul %18, %19, %cst_12 {dimension_numbers = #tpu.dot_dimension_numbers<[1], [0], [0], [1], [0, 0, 1, 1], [], []>} : vector<8x128xbf16>, vector<128x128xbf16>, vector<8x128xf32> -> vector<8x128xf32>
    %21 = vector.extract_strided_slice %0 {offsets = [2, 0], sizes = [1, 128], strides = [1, 1]} : vector<4x128xf32> to vector<1x128xf32>
    %22 = vector.broadcast %21 : vector<1x128xf32> to vector<8x128xf32>
    %23 = arith.addf %20, %22 : vector<8x128xf32>
    %cst_13 = arith.constant 0.000000e+00 : f32
    %24 = vector.broadcast %cst_13 : f32 to vector<8x128xf32>
    %25 = arith.maximumf %23, %24 : vector<8x128xf32>
    %26 = arith.truncf %25 : vector<8x128xf32> to vector<8x128xbf16>
    %c0_14 = arith.constant 0 : index
    %c0_15 = arith.constant 0 : index
    %27 = vector.load %arg5[%c0_14, %c0_15] : memref<128x128xbf16, #tpu.memory_space<vmem>>, vector<128x128xbf16>
    %cst_16 = arith.constant dense<0.000000e+00> : vector<8x128xf32>
    %28 = tpu.matmul %26, %27, %cst_16 {dimension_numbers = #tpu.dot_dimension_numbers<[1], [0], [0], [1], [0, 0, 1, 1], [], []>} : vector<8x128xbf16>, vector<128x128xbf16>, vector<8x128xf32> -> vector<8x128xf32>
    %29 = vector.extract_strided_slice %0 {offsets = [3, 0], sizes = [1, 128], strides = [1, 1]} : vector<4x128xf32> to vector<1x128xf32>
    %30 = vector.broadcast %29 : vector<1x128xf32> to vector<8x128xf32>
    %31 = arith.addf %28, %30 : vector<8x128xf32>
    %c0_17 = arith.constant 0 : index
    %c0_18 = arith.constant 0 : index
    %32 = vector.load %arg7[%c0_17, %c0_18] : memref<8x128xf32, #tpu.memory_space<vmem>>, vector<8x128xf32>
    tpu.vector_store %arg7[%c0_17, %c0_18], %31 {strides = array<i32>} : memref<8x128xf32, #tpu.memory_space<vmem>>, vector<8x128xf32>,
    return
  }
  func.func @transform_0(%arg0: i32) -> (i32, i32) {
    %c0_i32 = arith.constant 0 : i32
    %c0_i32_0 = arith.constant 0 : i32
    return %arg0, %c0_i32 : i32, i32
  }
  func.func @transform_1(%arg0: i32) -> (i32, i32) {
    %c0_i32 = arith.constant 0 : i32
    %c0_i32_0 = arith.constant 0 : i32
    %c0_i32_1 = arith.constant 0 : i32
    return %c0_i32, %c0_i32_0 : i32, i32
  }
  func.func @transform_2(%arg0: i32) -> (i32, i32) {
    %c0_i32 = arith.constant 0 : i32
    %c0_i32_0 = arith.constant 0 : i32
    %c0_i32_1 = arith.constant 0 : i32
    return %c0_i32, %c0_i32_0 : i32, i32
  }
  func.func @transform_3(%arg0: i32) -> (i32, i32) {
    %c0_i32 = arith.constant 0 : i32
    %c0_i32_0 = arith.constant 0 : i32
    %c0_i32_1 = arith.constant 0 : i32
    return %c0_i32, %c0_i32_0 : i32, i32
  }
  func.func @transform_4(%arg0: i32) -> (i32, i32) {
    %c0_i32 = arith.constant 0 : i32
    %c0_i32_0 = arith.constant 0 : i32
    %c0_i32_1 = arith.constant 0 : i32
    return %c0_i32, %c0_i32_0 : i32, i32
  }
  func.func @transform_5(%arg0: i32) -> (i32, i32) {
    %c0_i32 = arith.constant 0 : i32
    %c0_i32_0 = arith.constant 0 : i32
    %c0_i32_1 = arith.constant 0 : i32
    return %c0_i32, %c0_i32_0 : i32, i32
  }
  func.func @transform_6(%arg0: i32) -> (i32, i32) {
    %c0_i32 = arith.constant 0 : i32
    %c0_i32_0 = arith.constant 0 : i32
    return %arg0, %c0_i32 : i32, i32
  }
}

</mosaic_0001>

<llo_original>
// kernel: tpu_custom_call.1
$region0: #{tpu_custom_call.1}
  #allocation0 [shape = 'u32[]', space=smem, size = 0x4, offset = 0x4, fixed_abs, tag = 'smem constant byte address 0x4 - core index']
  #allocation1 [shape = 'u32[72,128]{1,0:T(1,128)}', space=vmem, size = 0x9000, scoped, tag = 'internal scratch']
  %s0 = inlined_call_operand.vmem [shape: f32[8,3072], index: 0, kind: input, shape index: {}]
  %s1 = inlined_call_operand.vmem [shape: bf16[3072,64], index: 1, kind: input, shape index: {}]
  %s2 = inlined_call_operand.vmem [shape: bf16[64,128], index: 2, kind: input, shape index: {}]
  %s3 = inlined_call_operand.vmem [shape: bf16[128,128], index: 3, kind: input, shape index: {}]
  %s4 = inlined_call_operand.vmem [shape: bf16[128,128], index: 4, kind: input, shape index: {}]
  %s5 = inlined_call_operand.vmem [shape: f32[4,128], index: 5, kind: input, shape index: {}]
  %s6 = inlined_call_operand.hbm [shape: f32[8,128], index: 6, kind: output, shape index: {}]
  %s7 = sld [smem:[#allocation0]]
  $region34: #{tpu_custom_call.1} parent=0
    _
  %s9 = ssub.s32 1, %s7
  %s10 = scalar_select 0, %s9, %s7
  $region1: #{tpu_custom_call.1} parent=0
    #allocation2 [shape = 'u8[4096]{0}', space=vmem, size = 0x1000, scoped, tag = 'output window, operand 0, single buffered']
    #allocation3 [shape = 's32[1]{0}', space=sflag, size = 0x4, scoped, tag = 'scoped memory for tpu_custom_call.1']
    %11 = vsyncpa [#allocation3], 0
    // Predicated region
    $region2: #{tpu_custom_call.1} parent=1 // pred_check
      _
    $region3: #{tpu_custom_call.1} parent=1 // pred_check_branch
      %13 = sbr.rel (0) target = $region5
    $region4: #{tpu_custom_call.1} parent=1 // pred_region
      _
    $region5: #{tpu_custom_call.1} parent=1 // pred_fallthru
      _
    // Predicated region
    $region6: #{tpu_custom_call.1} parent=1 // pred_check
      _
    $region7: #{tpu_custom_call.1} parent=1 // pred_check_branch
      %15 = sbr.rel (0) target = $region9
    $region8: #{tpu_custom_call.1} parent=1 // pred_region
      _
    $region9: #{tpu_custom_call.1} parent=1 // pred_fallthru
      _
    // Predicated region
    $region10: #{tpu_custom_call.1} parent=1 // pred_check
      _
    $region11: #{tpu_custom_call.1} parent=1 // pred_check_branch
      %17 = sbr.rel (0) target = $region13
    $region12: #{tpu_custom_call.1} parent=1 // pred_region
      _
    $region13: #{tpu_custom_call.1} parent=1 // pred_fallthru
      _
    // Predicated region
    $region14: #{tpu_custom_call.1} parent=1 // pred_check
      _
    $region15: #{tpu_custom_call.1} parent=1 // pred_check_branch
      %19 = sbr.rel (0) target = $region17
    $region16: #{tpu_custom_call.1} parent=1 // pred_region
      _
    $region17: #{tpu_custom_call.1} parent=1 // pred_fallthru
      _
    // Predicated region
    $region18: #{tpu_custom_call.1} parent=1 // pred_check
      _
    $region19: #{tpu_custom_call.1} parent=1 // pred_check_branch
      %21 = sbr.rel (0) target = $region21
    $region20: #{tpu_custom_call.1} parent=1 // pred_region
      _
    $region21: #{tpu_custom_call.1} parent=1 // pred_fallthru
      _
    // Predicated region
    $region22: #{tpu_custom_call.1} parent=1 // pred_check
      _
    $region23: #{tpu_custom_call.1} parent=1 // pred_check_branch
      %23 = sbr.rel (0) target = $region25
    $region24: #{tpu_custom_call.1} parent=1 // pred_region
      _
    $region25: #{tpu_custom_call.1} parent=1 // pred_fallthru
      _
    %v25 = vld [vmem:[%s5] sm:$0xf]
    %v26 = vld [vmem:[%s0] sm:$0xff]
    %v27 = vld [vmem:[%s0 + $0x8] sm:$0xff]
    %v28 = vld [vmem:[%s0 + $0x10] sm:$0xff]
    %v29 = vld [vmem:[%s0 + $0x18] sm:$0xff]
    %v30 = vld [vmem:[%s0 + $0x20] sm:$0xff]
    %v31 = vld [vmem:[%s0 + $0x28] sm:$0xff]
    %v32 = vld [vmem:[%s0 + $0x30] sm:$0xff]
    %v33 = vld [vmem:[%s0 + $0x38] sm:$0xff]
    %v34 = vld [vmem:[%s0 + $0x40] sm:$0xff]
    %v35 = vld [vmem:[%s0 + $0x48] sm:$0xff]
    %v36 = vld [vmem:[%s0 + $0x50] sm:$0xff]
    %v37 = vld [vmem:[%s0 + $0x58] sm:$0xff]
    %v38 = vld [vmem:[%s0 + $0x60] sm:$0xff]
    %v39 = vld [vmem:[%s0 + $0x68] sm:$0xff]
    %v40 = vld [vmem:[%s0 + $0x70] sm:$0xff]
    %v41 = vld [vmem:[%s0 + $0x78] sm:$0xff]
    %v42 = vld [vmem:[%s0 + $0x80] sm:$0xff]
    %v43 = vld [vmem:[%s0 + $0x88] sm:$0xff]
    %v44 = vld [vmem:[%s0 + $0x90] sm:$0xff]
    %v45 = vld [vmem:[%s0 + $0x98] sm:$0xff]
    %v46 = vld [vmem:[%s0 + $0xa0] sm:$0xff]
    %v47 = vld [vmem:[%s0 + $0xa8] sm:$0xff]
    %v48 = vld [vmem:[%s0 + $0xb0] sm:$0xff]
    %v49 = vld [vmem:[%s0 + $0xb8] sm:$0xff]
    %v50 = vpack.c.bf16 %v26, %v26
    %v51 = vpack.c.bf16 %v27, %v27
    %v52 = vpack.c.bf16 %v28, %v28
    %v53 = vpack.c.bf16 %v29, %v29
    %v54 = vpack.c.bf16 %v30, %v30
    %v55 = vpack.c.bf16 %v31, %v31
    %v56 = vpack.c.bf16 %v32, %v32
    %v57 = vpack.c.bf16 %v33, %v33
    %v58 = vpack.c.bf16 %v34, %v34
    %v59 = vpack.c.bf16 %v35, %v35
    %v60 = vpack.c.bf16 %v36, %v36
    %v61 = vpack.c.bf16 %v37, %v37
    %v62 = vpack.c.bf16 %v38, %v38
    %v63 = vpack.c.bf16 %v39, %v39
    %v64 = vpack.c.bf16 %v40, %v40
    %v65 = vpack.c.bf16 %v41, %v41
    %v66 = vpack.c.bf16 %v42, %v42
    %v67 = vpack.c.bf16 %v43, %v43
    %v68 = vpack.c.bf16 %v44, %v44
    %v69 = vpack.c.bf16 %v45, %v45
    %v70 = vpack.c.bf16 %v46, %v46
    %v71 = vpack.c.bf16 %v47, %v47
    %v72 = vpack.c.bf16 %v48, %v48
    %v73 = vpack.c.bf16 %v49, %v49
    %v74 = vld [vmem:[%s1] sm:$0xf]
    %v75 = vld [vmem:[%s1 + $0x4] sm:$0xf]
    %v76 = vld [vmem:[%s1 + $0x8] sm:$0xf]
    %v77 = vld [vmem:[%s1 + $0xc] sm:$0xf]
    %v78 = vld [vmem:[%s1 + $0x10] sm:$0xf]
    %v79 = vld [vmem:[%s1 + $0x14] sm:$0xf]
    %v80 = vld [vmem:[%s1 + $0x18] sm:$0xf]
    %v81 = vld [vmem:[%s1 + $0x1c] sm:$0xf]
    %v82 = vld [vmem:[%s1 + $0x20] sm:$0xf]
    %v83 = vld [vmem:[%s1 + $0x24] sm:$0xf]
    %v84 = vld [vmem:[%s1 + $0x28] sm:$0xf]
    %v85 = vld [vmem:[%s1 + $0x2c] sm:$0xf]
    %v86 = vld [vmem:[%s1 + $0x30] sm:$0xf]
    %v87 = vld [vmem:[%s1 + $0x34] sm:$0xf]
    %v88 = vld [vmem:[%s1 + $0x38] sm:$0xf]
    %v89 = vld [vmem:[%s1 + $0x3c] sm:$0xf]
    %v90 = vld [vmem:[%s1 + $0x40] sm:$0xf]
    %v91 = vld [vmem:[%s1 + $0x44] sm:$0xf]
    %v92 = vld [vmem:[%s1 + $0x48] sm:$0xf]
    %v93 = vld [vmem:[%s1 + $0x4c] sm:$0xf]
    %v94 = vld [vmem:[%s1 + $0x50] sm:$0xf]
    %v95 = vld [vmem:[%s1 + $0x54] sm:$0xf]
    %v96 = vld [vmem:[%s1 + $0x58] sm:$0xf]
    %v97 = vld [vmem:[%s1 + $0x5c] sm:$0xf]
    %v98 = vld [vmem:[%s1 + $0x60] sm:$0xf]
    %v99 = vld [vmem:[%s1 + $0x64] sm:$0xf]
    %v100 = vld [vmem:[%s1 + $0x68] sm:$0xf]
    %v101 = vld [vmem:[%s1 + $0x6c] sm:$0xf]
    %v102 = vld [vmem:[%s1 + $0x70] sm:$0xf]
    %v103 = vld [vmem:[%s1 + $0x74] sm:$0xf]
    %v104 = vld [vmem:[%s1 + $0x78] sm:$0xf]
    %v105 = vld [vmem:[%s1 + $0x7c] sm:$0xf]
    %v106 = vld [vmem:[%s1 + $0x80] sm:$0xf]
    %v107 = vld [vmem:[%s1 + $0x84] sm:$0xf]
    %v108 = vld [vmem:[%s1 + $0x88] sm:$0xf]
    %v109 = vld [vmem:[%s1 + $0x8c] sm:$0xf]
    %v110 = vld [vmem:[%s1 + $0x90] sm:$0xf]
    %v111 = vld [vmem:[%s1 + $0x94] sm:$0xf]
    %v112 = vld [vmem:[%s1 + $0x98] sm:$0xf]
    %v113 = vld [vmem:[%s1 + $0x9c] sm:$0xf]
    %v114 = vld [vmem:[%s1 + $0xa0] sm:$0xf]
    %v115 = vld [vmem:[%s1 + $0xa4] sm:$0xf]
    %v116 = vld [vmem:[%s1 + $0xa8] sm:$0xf]
    %v117 = vld [vmem:[%s1 + $0xac] sm:$0xf]
    %v118 = vld [vmem:[%s1 + $0xb0] sm:$0xf]
    %v119 = vld [vmem:[%s1 + $0xb4] sm:$0xf]
    %v120 = vld [vmem:[%s1 + $0xb8] sm:$0xf]
    %v121 = vld [vmem:[%s1 + $0xbc] sm:$0xf]
    %v122 = vld [vmem:[%s1 + $0xc0] sm:$0xf]
    %v123 = vld [vmem:[%s1 + $0xc4] sm:$0xf]
    %v124 = vld [vmem:[%s1 + $0xc8] sm:$0xf]
    %v125 = vld [vmem:[%s1 + $0xcc] sm:$0xf]
    %v126 = vld [vmem:[%s1 + $0xd0] sm:$0xf]
    %v127 = vld [vmem:[%s1 + $0xd4] sm:$0xf]
    %v128 = vld [vmem:[%s1 + $0xd8] sm:$0xf]
    %v129 = vld [vmem:[%s1 + $0xdc] sm:$0xf]
    %v130 = vld [vmem:[%s1 + $0xe0] sm:$0xf]
    %v131 = vld [vmem:[%s1 + $0xe4] sm:$0xf]
    %v132 = vld [vmem:[%s1 + $0xe8] sm:$0xf]
    %v133 = vld [vmem:[%s1 + $0xec] sm:$0xf]
    %v134 = vld [vmem:[%s1 + $0xf0] sm:$0xf]
    %v135 = vld [vmem:[%s1 + $0xf4] sm:$0xf]
    %v136 = vld [vmem:[%s1 + $0xf8] sm:$0xf]
    %v137 = vld [vmem:[%s1 + $0xfc] sm:$0xf]
    %v138 = vld [vmem:[%s1 + $0x100] sm:$0xf]
    %v139 = vld [vmem:[%s1 + $0x104] sm:$0xf]
    %v140 = vld [vmem:[%s1 + $0x108] sm:$0xf]
    %v141 = vld [vmem:[%s1 + $0x10c] sm:$0xf]
    %v142 = vld [vmem:[%s1 + $0x110] sm:$0xf]
    %v143 = vld [vmem:[%s1 + $0x114] sm:$0xf]
    %v144 = vld [vmem:[%s1 + $0x118] sm:$0xf]
    %v145 = vld [vmem:[%s1 + $0x11c] sm:$0xf]
    %v146 = vld [vmem:[%s1 + $0x120] sm:$0xf]
    %v147 = vld [vmem:[%s1 + $0x124] sm:$0xf]
    %v148 = vld [vmem:[%s1 + $0x128] sm:$0xf]
    %v149 = vld [vmem:[%s1 + $0x12c] sm:$0xf]
    %v150 = vld [vmem:[%s1 + $0x130] sm:$0xf]
    %v151 = vld [vmem:[%s1 + $0x134] sm:$0xf]
    %v152 = vld [vmem:[%s1 + $0x138] sm:$0xf]
    %v153 = vld [vmem:[%s1 + $0x13c] sm:$0xf]
    %v154 = vld [vmem:[%s1 + $0x140] sm:$0xf]
    %v155 = vld [vmem:[%s1 + $0x144] sm:$0xf]
    %v156 = vld [vmem:[%s1 + $0x148] sm:$0xf]
    %v157 = vld [vmem:[%s1 + $0x14c] sm:$0xf]
    %v158 = vld [vmem:[%s1 + $0x150] sm:$0xf]
    %v159 = vld [vmem:[%s1 + $0x154] sm:$0xf]
    %v160 = vld [vmem:[%s1 + $0x158] sm:$0xf]
    %v161 = vld [vmem:[%s1 + $0x15c] sm:$0xf]
    %v162 = vld [vmem:[%s1 + $0x160] sm:$0xf]
    %v163 = vld [vmem:[%s1 + $0x164] sm:$0xf]
    %v164 = vld [vmem:[%s1 + $0x168] sm:$0xf]
    %v165 = vld [vmem:[%s1 + $0x16c] sm:$0xf]
    %v166 = vld [vmem:[%s1 + $0x170] sm:$0xf]
    %v167 = vld [vmem:[%s1 + $0x174] sm:$0xf]
    %v168 = vld [vmem:[%s1 + $0x178] sm:$0xf]
    %v169 = vld [vmem:[%s1 + $0x17c] sm:$0xf]
    %v170 = vld [vmem:[%s1 + $0x180] sm:$0xf]
    %v171 = vld [vmem:[%s1 + $0x184] sm:$0xf]
    %v172 = vld [vmem:[%s1 + $0x188] sm:$0xf]
    %v173 = vld [vmem:[%s1 + $0x18c] sm:$0xf]
    %v174 = vld [vmem:[%s1 + $0x190] sm:$0xf]
    %v175 = vld [vmem:[%s1 + $0x194] sm:$0xf]
    %v176 = vld [vmem:[%s1 + $0x198] sm:$0xf]
    %v177 = vld [vmem:[%s1 + $0x19c] sm:$0xf]
    %v178 = vld [vmem:[%s1 + $0x1a0] sm:$0xf]
    %v179 = vld [vmem:[%s1 + $0x1a4] sm:$0xf]
    %v180 = vld [vmem:[%s1 + $0x1a8] sm:$0xf]
    %v181 = vld [vmem:[%s1 + $0x1ac] sm:$0xf]
    %v182 = vld [vmem:[%s1 + $0x1b0] sm:$0xf]
    %v183 = vld [vmem:[%s1 + $0x1b4] sm:$0xf]
    %v184 = vld [vmem:[%s1 + $0x1b8] sm:$0xf]
    %v185 = vld [vmem:[%s1 + $0x1bc] sm:$0xf]
    %v186 = vld [vmem:[%s1 + $0x1c0] sm:$0xf]
    %v187 = vld [vmem:[%s1 + $0x1c4] sm:$0xf]
    %v188 = vld [vmem:[%s1 + $0x1c8] sm:$0xf]
    %v189 = vld [vmem:[%s1 + $0x1cc] sm:$0xf]
    %v190 = vld [vmem:[%s1 + $0x1d0] sm:$0xf]
    %v191 = vld [vmem:[%s1 + $0x1d4] sm:$0xf]
    %v192 = vld [vmem:[%s1 + $0x1d8] sm:$0xf]
    %v193 = vld [vmem:[%s1 + $0x1dc] sm:$0xf]
    %v194 = vld [vmem:[%s1 + $0x1e0] sm:$0xf]
    %v195 = vld [vmem:[%s1 + $0x1e4] sm:$0xf]
    %v196 = vld [vmem:[%s1 + $0x1e8] sm:$0xf]
    %v197 = vld [vmem:[%s1 + $0x1ec] sm:$0xf]
    %v198 = vld [vmem:[%s1 + $0x1f0] sm:$0xf]
    %v199 = vld [vmem:[%s1 + $0x1f4] sm:$0xf]
    %v200 = vld [vmem:[%s1 + $0x1f8] sm:$0xf]
    %v201 = vld [vmem:[%s1 + $0x1fc] sm:$0xf]
    %v202 = vld [vmem:[%s1 + $0x200] sm:$0xf]
    %v203 = vld [vmem:[%s1 + $0x204] sm:$0xf]
    %v204 = vld [vmem:[%s1 + $0x208] sm:$0xf]
    %v205 = vld [vmem:[%s1 + $0x20c] sm:$0xf]
    %v206 = vld [vmem:[%s1 + $0x210] sm:$0xf]
    %v207 = vld [vmem:[%s1 + $0x214] sm:$0xf]
    %v208 = vld [vmem:[%s1 + $0x218] sm:$0xf]
    %v209 = vld [vmem:[%s1 + $0x21c] sm:$0xf]
    %v210 = vld [vmem:[%s1 + $0x220] sm:$0xf]
    %v211 = vld [vmem:[%s1 + $0x224] sm:$0xf]
    %v212 = vld [vmem:[%s1 + $0x228] sm:$0xf]
    %v213 = vld [vmem:[%s1 + $0x22c] sm:$0xf]
    %v214 = vld [vmem:[%s1 + $0x230] sm:$0xf]
    %v215 = vld [vmem:[%s1 + $0x234] sm:$0xf]
    %v216 = vld [vmem:[%s1 + $0x238] sm:$0xf]
    %v217 = vld [vmem:[%s1 + $0x23c] sm:$0xf]
    %v218 = vld [vmem:[%s1 + $0x240] sm:$0xf]
    %v219 = vld [vmem:[%s1 + $0x244] sm:$0xf]
    %v220 = vld [vmem:[%s1 + $0x248] sm:$0xf]
    %v221 = vld [vmem:[%s1 + $0x24c] sm:$0xf]
    %v222 = vld [vmem:[%s1 + $0x250] sm:$0xf]
    %v223 = vld [vmem:[%s1 + $0x254] sm:$0xf]
    %v224 = vld [vmem:[%s1 + $0x258] sm:$0xf]
    %v225 = vld [vmem:[%s1 + $0x25c] sm:$0xf]
    %v226 = vld [vmem:[%s1 + $0x260] sm:$0xf]
    %v227 = vld [vmem:[%s1 + $0x264] sm:$0xf]
    %v228 = vld [vmem:[%s1 + $0x268] sm:$0xf]
    %v229 = vld [vmem:[%s1 + $0x26c] sm:$0xf]
    %v230 = vld [vmem:[%s1 + $0x270] sm:$0xf]
    %v231 = vld [vmem:[%s1 + $0x274] sm:$0xf]
    %v232 = vld [vmem:[%s1 + $0x278] sm:$0xf]
    %v233 = vld [vmem:[%s1 + $0x27c] sm:$0xf]
    %v234 = vld [vmem:[%s1 + $0x280] sm:$0xf]
    %v235 = vld [vmem:[%s1 + $0x284] sm:$0xf]
    %v236 = vld [vmem:[%s1 + $0x288] sm:$0xf]
    %v237 = vld [vmem:[%s1 + $0x28c] sm:$0xf]
    %v238 = vld [vmem:[%s1 + $0x290] sm:$0xf]
    %v239 = vld [vmem:[%s1 + $0x294] sm:$0xf]
    %v240 = vld [vmem:[%s1 + $0x298] sm:$0xf]
    %v241 = vld [vmem:[%s1 + $0x29c] sm:$0xf]
    %v242 = vld [vmem:[%s1 + $0x2a0] sm:$0xf]
    %v243 = vld [vmem:[%s1 + $0x2a4] sm:$0xf]
    %v244 = vld [vmem:[%s1 + $0x2a8] sm:$0xf]
    %v245 = vld [vmem:[%s1 + $0x2ac] sm:$0xf]
    %v246 = vld [vmem:[%s1 + $0x2b0] sm:$0xf]
    %v247 = vld [vmem:[%s1 + $0x2b4] sm:$0xf]
    %v248 = vld [vmem:[%s1 + $0x2b8] sm:$0xf]
    %v249 = vld [vmem:[%s1 + $0x2bc] sm:$0xf]
    %v250 = vld [vmem:[%s1 + $0x2c0] sm:$0xf]
    %v251 = vld [vmem:[%s1 + $0x2c4] sm:$0xf]
    %v252 = vld [vmem:[%s1 + $0x2c8] sm:$0xf]
    %v253 = vld [vmem:[%s1 + $0x2cc] sm:$0xf]
    %v254 = vld [vmem:[%s1 + $0x2d0] sm:$0xf]
    %v255 = vld [vmem:[%s1 + $0x2d4] sm:$0xf]
    %v256 = vld [vmem:[%s1 + $0x2d8] sm:$0xf]
    %v257 = vld [vmem:[%s1 + $0x2dc] sm:$0xf]
    %v258 = vld [vmem:[%s1 + $0x2e0] sm:$0xf]
    %v259 = vld [vmem:[%s1 + $0x2e4] sm:$0xf]
    %v260 = vld [vmem:[%s1 + $0x2e8] sm:$0xf]
    %v261 = vld [vmem:[%s1 + $0x2ec] sm:$0xf]
    %v262 = vld [vmem:[%s1 + $0x2f0] sm:$0xf]
    %v263 = vld [vmem:[%s1 + $0x2f4] sm:$0xf]
    %v264 = vld [vmem:[%s1 + $0x2f8] sm:$0xf]
    %v265 = vld [vmem:[%s1 + $0x2fc] sm:$0xf]
    %v266 = vld [vmem:[%s1 + $0x300] sm:$0xf]
    %v267 = vld [vmem:[%s1 + $0x304] sm:$0xf]
    %v268 = vld [vmem:[%s1 + $0x308] sm:$0xf]
    %v269 = vld [vmem:[%s1 + $0x30c] sm:$0xf]
    %v270 = vld [vmem:[%s1 + $0x310] sm:$0xf]
    %v271 = vld [vmem:[%s1 + $0x314] sm:$0xf]
    %v272 = vld [vmem:[%s1 + $0x318] sm:$0xf]
    %v273 = vld [vmem:[%s1 + $0x31c] sm:$0xf]
    %v274 = vld [vmem:[%s1 + $0x320] sm:$0xf]
    %v275 = vld [vmem:[%s1 + $0x324] sm:$0xf]
    %v276 = vld [vmem:[%s1 + $0x328] sm:$0xf]
    %v277 = vld [vmem:[%s1 + $0x32c] sm:$0xf]
    %v278 = vld [vmem:[%s1 + $0x330] sm:$0xf]
    %v279 = vld [vmem:[%s1 + $0x334] sm:$0xf]
    %v280 = vld [vmem:[%s1 + $0x338] sm:$0xf]
    %v281 = vld [vmem:[%s1 + $0x33c] sm:$0xf]
    %v282 = vld [vmem:[%s1 + $0x340] sm:$0xf]
    %v283 = vld [vmem:[%s1 + $0x344] sm:$0xf]
    %v284 = vld [vmem:[%s1 + $0x348] sm:$0xf]
    %v285 = vld [vmem:[%s1 + $0x34c] sm:$0xf]
    %v286 = vld [vmem:[%s1 + $0x350] sm:$0xf]
    %v287 = vld [vmem:[%s1 + $0x354] sm:$0xf]
    %v288 = vld [vmem:[%s1 + $0x358] sm:$0xf]
    %v289 = vld [vmem:[%s1 + $0x35c] sm:$0xf]
    %v290 = vld [vmem:[%s1 + $0x360] sm:$0xf]
    %v291 = vld [vmem:[%s1 + $0x364] sm:$0xf]
    %v292 = vld [vmem:[%s1 + $0x368] sm:$0xf]
    %v293 = vld [vmem:[%s1 + $0x36c] sm:$0xf]
    %v294 = vld [vmem:[%s1 + $0x370] sm:$0xf]
    %v295 = vld [vmem:[%s1 + $0x374] sm:$0xf]
    %v296 = vld [vmem:[%s1 + $0x378] sm:$0xf]
    %v297 = vld [vmem:[%s1 + $0x37c] sm:$0xf]
    %v298 = vld [vmem:[%s1 + $0x380] sm:$0xf]
    %v299 = vld [vmem:[%s1 + $0x384] sm:$0xf]
    %v300 = vld [vmem:[%s1 + $0x388] sm:$0xf]
    %v301 = vld [vmem:[%s1 + $0x38c] sm:$0xf]
    %v302 = vld [vmem:[%s1 + $0x390] sm:$0xf]
    %v303 = vld [vmem:[%s1 + $0x394] sm:$0xf]
    %v304 = vld [vmem:[%s1 + $0x398] sm:$0xf]
    %v305 = vld [vmem:[%s1 + $0x39c] sm:$0xf]
    %v306 = vld [vmem:[%s1 + $0x3a0] sm:$0xf]
    %v307 = vld [vmem:[%s1 + $0x3a4] sm:$0xf]
    %v308 = vld [vmem:[%s1 + $0x3a8] sm:$0xf]
    %v309 = vld [vmem:[%s1 + $0x3ac] sm:$0xf]
    %v310 = vld [vmem:[%s1 + $0x3b0] sm:$0xf]
    %v311 = vld [vmem:[%s1 + $0x3b4] sm:$0xf]
    %v312 = vld [vmem:[%s1 + $0x3b8] sm:$0xf]
    %v313 = vld [vmem:[%s1 + $0x3bc] sm:$0xf]
    %v314 = vld [vmem:[%s1 + $0x3c0] sm:$0xf]
    %v315 = vld [vmem:[%s1 + $0x3c4] sm:$0xf]
    %v316 = vld [vmem:[%s1 + $0x3c8] sm:$0xf]
    %v317 = vld [vmem:[%s1 + $0x3cc] sm:$0xf]
    %v318 = vld [vmem:[%s1 + $0x3d0] sm:$0xf]
    %v319 = vld [vmem:[%s1 + $0x3d4] sm:$0xf]
    %v320 = vld [vmem:[%s1 + $0x3d8] sm:$0xf]
    %v321 = vld [vmem:[%s1 + $0x3dc] sm:$0xf]
    %v322 = vld [vmem:[%s1 + $0x3e0] sm:$0xf]
    %v323 = vld [vmem:[%s1 + $0x3e4] sm:$0xf]
    %v324 = vld [vmem:[%s1 + $0x3e8] sm:$0xf]
    %v325 = vld [vmem:[%s1 + $0x3ec] sm:$0xf]
    %v326 = vld [vmem:[%s1 + $0x3f0] sm:$0xf]
    %v327 = vld [vmem:[%s1 + $0x3f4] sm:$0xf]
    %v328 = vld [vmem:[%s1 + $0x3f8] sm:$0xf]
    %v329 = vld [vmem:[%s1 + $0x3fc] sm:$0xf]
    %v330 = vld [vmem:[%s1 + $0x400] sm:$0xf]
    %v331 = vld [vmem:[%s1 + $0x404] sm:$0xf]
    %v332 = vld [vmem:[%s1 + $0x408] sm:$0xf]
    %v333 = vld [vmem:[%s1 + $0x40c] sm:$0xf]
    %v334 = vld [vmem:[%s1 + $0x410] sm:$0xf]
    %v335 = vld [vmem:[%s1 + $0x414] sm:$0xf]
    %v336 = vld [vmem:[%s1 + $0x418] sm:$0xf]
    %v337 = vld [vmem:[%s1 + $0x41c] sm:$0xf]
    %v338 = vld [vmem:[%s1 + $0x420] sm:$0xf]
    %v339 = vld [vmem:[%s1 + $0x424] sm:$0xf]
    %v340 = vld [vmem:[%s1 + $0x428] sm:$0xf]
    %v341 = vld [vmem:[%s1 + $0x42c] sm:$0xf]
    %v342 = vld [vmem:[%s1 + $0x430] sm:$0xf]
    %v343 = vld [vmem:[%s1 + $0x434] sm:$0xf]
    %v344 = vld [vmem:[%s1 + $0x438] sm:$0xf]
    %v345 = vld [vmem:[%s1 + $0x43c] sm:$0xf]
    %v346 = vld [vmem:[%s1 + $0x440] sm:$0xf]
    %v347 = vld [vmem:[%s1 + $0x444] sm:$0xf]
    %v348 = vld [vmem:[%s1 + $0x448] sm:$0xf]
    %v349 = vld [vmem:[%s1 + $0x44c] sm:$0xf]
    %v350 = vld [vmem:[%s1 + $0x450] sm:$0xf]
    %v351 = vld [vmem:[%s1 + $0x454] sm:$0xf]
    %v352 = vld [vmem:[%s1 + $0x458] sm:$0xf]
    %v353 = vld [vmem:[%s1 + $0x45c] sm:$0xf]
    %v354 = vld [vmem:[%s1 + $0x460] sm:$0xf]
    %v355 = vld [vmem:[%s1 + $0x464] sm:$0xf]
    %v356 = vld [vmem:[%s1 + $0x468] sm:$0xf]
    %v357 = vld [vmem:[%s1 + $0x46c] sm:$0xf]
    %v358 = vld [vmem:[%s1 + $0x470] sm:$0xf]
    %v359 = vld [vmem:[%s1 + $0x474] sm:$0xf]
    %v360 = vld [vmem:[%s1 + $0x478] sm:$0xf]
    %v361 = vld [vmem:[%s1 + $0x47c] sm:$0xf]
    %v362 = vld [vmem:[%s1 + $0x480] sm:$0xf]
    %v363 = vld [vmem:[%s1 + $0x484] sm:$0xf]
    %v364 = vld [vmem:[%s1 + $0x488] sm:$0xf]
    %v365 = vld [vmem:[%s1 + $0x48c] sm:$0xf]
    %v366 = vld [vmem:[%s1 + $0x490] sm:$0xf]
    %v367 = vld [vmem:[%s1 + $0x494] sm:$0xf]
    %v368 = vld [vmem:[%s1 + $0x498] sm:$0xf]
    %v369 = vld [vmem:[%s1 + $0x49c] sm:$0xf]
    %v370 = vld [vmem:[%s1 + $0x4a0] sm:$0xf]
    %v371 = vld [vmem:[%s1 + $0x4a4] sm:$0xf]
    %v372 = vld [vmem:[%s1 + $0x4a8] sm:$0xf]
    %v373 = vld [vmem:[%s1 + $0x4ac] sm:$0xf]
    %v374 = vld [vmem:[%s1 + $0x4b0] sm:$0xf]
    %v375 = vld [vmem:[%s1 + $0x4b4] sm:$0xf]
    %v376 = vld [vmem:[%s1 + $0x4b8] sm:$0xf]
    %v377 = vld [vmem:[%s1 + $0x4bc] sm:$0xf]
    %v378 = vld [vmem:[%s1 + $0x4c0] sm:$0xf]
    %v379 = vld [vmem:[%s1 + $0x4c4] sm:$0xf]
    %v380 = vld [vmem:[%s1 + $0x4c8] sm:$0xf]
    %v381 = vld [vmem:[%s1 + $0x4cc] sm:$0xf]
    %v382 = vld [vmem:[%s1 + $0x4d0] sm:$0xf]
    %v383 = vld [vmem:[%s1 + $0x4d4] sm:$0xf]
    %v384 = vld [vmem:[%s1 + $0x4d8] sm:$0xf]
    %v385 = vld [vmem:[%s1 + $0x4dc] sm:$0xf]
    %v386 = vld [vmem:[%s1 + $0x4e0] sm:$0xf]
    %v387 = vld [vmem:[%s1 + $0x4e4] sm:$0xf]
    %v388 = vld [vmem:[%s1 + $0x4e8] sm:$0xf]
    %v389 = vld [vmem:[%s1 + $0x4ec] sm:$0xf]
    %v390 = vld [vmem:[%s1 + $0x4f0] sm:$0xf]
    %v391 = vld [vmem:[%s1 + $0x4f4] sm:$0xf]
    %v392 = vld [vmem:[%s1 + $0x4f8] sm:$0xf]
    %v393 = vld [vmem:[%s1 + $0x4fc] sm:$0xf]
    %v394 = vld [vmem:[%s1 + $0x500] sm:$0xf]
    %v395 = vld [vmem:[%s1 + $0x504] sm:$0xf]
    %v396 = vld [vmem:[%s1 + $0x508] sm:$0xf]
    %v397 = vld [vmem:[%s1 + $0x50c] sm:$0xf]
    %v398 = vld [vmem:[%s1 + $0x510] sm:$0xf]
    %v399 = vld [vmem:[%s1 + $0x514] sm:$0xf]
    %v400 = vld [vmem:[%s1 + $0x518] sm:$0xf]
    %v401 = vld [vmem:[%s1 + $0x51c] sm:$0xf]
    %v402 = vld [vmem:[%s1 + $0x520] sm:$0xf]
    %v403 = vld [vmem:[%s1 + $0x524] sm:$0xf]
    %v404 = vld [vmem:[%s1 + $0x528] sm:$0xf]
    %v405 = vld [vmem:[%s1 + $0x52c] sm:$0xf]
    %v406 = vld [vmem:[%s1 + $0x530] sm:$0xf]
    %v407 = vld [vmem:[%s1 + $0x534] sm:$0xf]
    %v408 = vld [vmem:[%s1 + $0x538] sm:$0xf]
    %v409 = vld [vmem:[%s1 + $0x53c] sm:$0xf]
    %v410 = vld [vmem:[%s1 + $0x540] sm:$0xf]
    %v411 = vld [vmem:[%s1 + $0x544] sm:$0xf]
    %v412 = vld [vmem:[%s1 + $0x548] sm:$0xf]
    %v413 = vld [vmem:[%s1 + $0x54c] sm:$0xf]
    %v414 = vld [vmem:[%s1 + $0x550] sm:$0xf]
    %v415 = vld [vmem:[%s1 + $0x554] sm:$0xf]
    %v416 = vld [vmem:[%s1 + $0x558] sm:$0xf]
    %v417 = vld [vmem:[%s1 + $0x55c] sm:$0xf]
    %v418 = vld [vmem:[%s1 + $0x560] sm:$0xf]
    %v419 = vld [vmem:[%s1 + $0x564] sm:$0xf]
    %v420 = vld [vmem:[%s1 + $0x568] sm:$0xf]
    %v421 = vld [vmem:[%s1 + $0x56c] sm:$0xf]
    %v422 = vld [vmem:[%s1 + $0x570] sm:$0xf]
    %v423 = vld [vmem:[%s1 + $0x574] sm:$0xf]
    %v424 = vld [vmem:[%s1 + $0x578] sm:$0xf]
    %v425 = vld [vmem:[%s1 + $0x57c] sm:$0xf]
    %v426 = vld [vmem:[%s1 + $0x580] sm:$0xf]
    %v427 = vld [vmem:[%s1 + $0x584] sm:$0xf]
    %v428 = vld [vmem:[%s1 + $0x588] sm:$0xf]
    %v429 = vld [vmem:[%s1 + $0x58c] sm:$0xf]
    %v430 = vld [vmem:[%s1 + $0x590] sm:$0xf]
    %v431 = vld [vmem:[%s1 + $0x594] sm:$0xf]
    %v432 = vld [vmem:[%s1 + $0x598] sm:$0xf]
    %v433 = vld [vmem:[%s1 + $0x59c] sm:$0xf]
    %v434 = vld [vmem:[%s1 + $0x5a0] sm:$0xf]
    %v435 = vld [vmem:[%s1 + $0x5a4] sm:$0xf]
    %v436 = vld [vmem:[%s1 + $0x5a8] sm:$0xf]
    %v437 = vld [vmem:[%s1 + $0x5ac] sm:$0xf]
    %v438 = vld [vmem:[%s1 + $0x5b0] sm:$0xf]
    %v439 = vld [vmem:[%s1 + $0x5b4] sm:$0xf]
    %v440 = vld [vmem:[%s1 + $0x5b8] sm:$0xf]
    %v441 = vld [vmem:[%s1 + $0x5bc] sm:$0xf]
    %v442 = vld [vmem:[%s1 + $0x5c0] sm:$0xf]
    %v443 = vld [vmem:[%s1 + $0x5c4] sm:$0xf]
    %v444 = vld [vmem:[%s1 + $0x5c8] sm:$0xf]
    %v445 = vld [vmem:[%s1 + $0x5cc] sm:$0xf]
    %v446 = vld [vmem:[%s1 + $0x5d0] sm:$0xf]
    %v447 = vld [vmem:[%s1 + $0x5d4] sm:$0xf]
    %v448 = vld [vmem:[%s1 + $0x5d8] sm:$0xf]
    %v449 = vld [vmem:[%s1 + $0x5dc] sm:$0xf]
    %v450 = vld [vmem:[%s1 + $0x5e0] sm:$0xf]
    %v451 = vld [vmem:[%s1 + $0x5e4] sm:$0xf]
    %v452 = vld [vmem:[%s1 + $0x5e8] sm:$0xf]
    %v453 = vld [vmem:[%s1 + $0x5ec] sm:$0xf]
    %v454 = vld [vmem:[%s1 + $0x5f0] sm:$0xf]
    %v455 = vld [vmem:[%s1 + $0x5f4] sm:$0xf]
    %v456 = vld [vmem:[%s1 + $0x5f8] sm:$0xf]
    %v457 = vld [vmem:[%s1 + $0x5fc] sm:$0xf]
    %v458 = vperm.slane %v25, 0
    %v843 = vunpack.c.l.b16 %v74
    %v844 = vunpack.c.l.b16 %v75
    %v845 = vunpack.c.l.b16 %v76
    %v846 = vunpack.c.l.b16 %v77
    %v847 = vunpack.c.l.b16 %v78
    %v848 = vunpack.c.l.b16 %v79
    %v849 = vunpack.c.l.b16 %v80
    %v850 = vunpack.c.l.b16 %v81
    %v851 = vunpack.c.l.b16 %v82
    %v852 = vunpack.c.l.b16 %v83
    %v853 = vunpack.c.l.b16 %v84
    %v854 = vunpack.c.l.b16 %v85
    %v855 = vunpack.c.l.b16 %v86
    %v856 = vunpack.c.l.b16 %v87
    %v857 = vunpack.c.l.b16 %v88
    %v858 = vunpack.c.l.b16 %v89
    %v859 = vunpack.c.l.b16 %v90
    %v860 = vunpack.c.l.b16 %v91
    %v861 = vunpack.c.l.b16 %v92
    %v862 = vunpack.c.l.b16 %v93
    %v863 = vunpack.c.l.b16 %v94
    %v864 = vunpack.c.l.b16 %v95
    %v865 = vunpack.c.l.b16 %v96
    %v866 = vunpack.c.l.b16 %v97
    %v867 = vunpack.c.l.b16 %v98
    %v868 = vunpack.c.l.b16 %v99
    %v869 = vunpack.c.l.b16 %v100
    %v870 = vunpack.c.l.b16 %v101
    %v871 = vunpack.c.l.b16 %v102
    %v872 = vunpack.c.l.b16 %v103
    %v873 = vunpack.c.l.b16 %v104
    %v874 = vunpack.c.l.b16 %v105
    %v875 = vunpack.c.l.b16 %v106
    %v876 = vunpack.c.l.b16 %v107
    %v877 = vunpack.c.l.b16 %v108
    %v878 = vunpack.c.l.b16 %v109
    %v879 = vunpack.c.l.b16 %v110
    %v880 = vunpack.c.l.b16 %v111
    %v881 = vunpack.c.l.b16 %v112
    %v882 = vunpack.c.l.b16 %v113
    %v883 = vunpack.c.l.b16 %v114
    %v884 = vunpack.c.l.b16 %v115
    %v885 = vunpack.c.l.b16 %v116
    %v886 = vunpack.c.l.b16 %v117
    %v887 = vunpack.c.l.b16 %v118
    %v888 = vunpack.c.l.b16 %v119
    %v889 = vunpack.c.l.b16 %v120
    %v890 = vunpack.c.l.b16 %v121
    %v891 = vunpack.c.l.b16 %v122
    %v892 = vunpack.c.l.b16 %v123
    %v893 = vunpack.c.l.b16 %v124
    %v894 = vunpack.c.l.b16 %v125
    %v895 = vunpack.c.l.b16 %v126
    %v896 = vunpack.c.l.b16 %v127
    %v897 = vunpack.c.l.b16 %v128
    %v898 = vunpack.c.l.b16 %v129
    %v899 = vunpack.c.l.b16 %v130
    %v900 = vunpack.c.l.b16 %v131
    %v901 = vunpack.c.l.b16 %v132
    %v902 = vunpack.c.l.b16 %v133
    %v903 = vunpack.c.l.b16 %v134
    %v904 = vunpack.c.l.b16 %v135
    %v905 = vunpack.c.l.b16 %v136
    %v906 = vunpack.c.l.b16 %v137
    %v907 = vunpack.c.l.b16 %v138
    %v908 = vunpack.c.l.b16 %v139
    %v909 = vunpack.c.l.b16 %v140
    %v910 = vunpack.c.l.b16 %v141
    %v911 = vunpack.c.l.b16 %v142
    %v912 = vunpack.c.l.b16 %v143
    %v913 = vunpack.c.l.b16 %v144
    %v914 = vunpack.c.l.b16 %v145
    %v915 = vunpack.c.l.b16 %v146
    %v916 = vunpack.c.l.b16 %v147
    %v917 = vunpack.c.l.b16 %v148
    %v918 = vunpack.c.l.b16 %v149
    %v919 = vunpack.c.l.b16 %v150
    %v920 = vunpack.c.l.b16 %v151
    %v921 = vunpack.c.l.b16 %v152
    %v922 = vunpack.c.l.b16 %v153
    %v923 = vunpack.c.l.b16 %v154
    %v924 = vunpack.c.l.b16 %v155
    %v925 = vunpack.c.l.b16 %v156
    %v926 = vunpack.c.l.b16 %v157
    %v927 = vunpack.c.l.b16 %v158
    %v928 = vunpack.c.l.b16 %v159
    %v929 = vunpack.c.l.b16 %v160
    %v930 = vunpack.c.l.b16 %v161
    %v931 = vunpack.c.l.b16 %v162
    %v932 = vunpack.c.l.b16 %v163
    %v933 = vunpack.c.l.b16 %v164
    %v934 = vunpack.c.l.b16 %v165
    %v935 = vunpack.c.l.b16 %v166
    %v936 = vunpack.c.l.b16 %v167
    %v937 = vunpack.c.l.b16 %v168
    %v938 = vunpack.c.l.b16 %v169
    %v939 = vunpack.c.l.b16 %v170
    %v940 = vunpack.c.l.b16 %v171
    %v941 = vunpack.c.l.b16 %v172
    %v942 = vunpack.c.l.b16 %v173
    %v943 = vunpack.c.l.b16 %v174
    %v944 = vunpack.c.l.b16 %v175
    %v945 = vunpack.c.l.b16 %v176
    %v946 = vunpack.c.l.b16 %v177
    %v947 = vunpack.c.l.b16 %v178
    %v948 = vunpack.c.l.b16 %v179
    %v949 = vunpack.c.l.b16 %v180
    %v950 = vunpack.c.l.b16 %v181
    %v951 = vunpack.c.l.b16 %v182
    %v952 = vunpack.c.l.b16 %v183
    %v953 = vunpack.c.l.b16 %v184
    %v954 = vunpack.c.l.b16 %v185
    %v955 = vunpack.c.l.b16 %v186
    %v956 = vunpack.c.l.b16 %v187
    %v957 = vunpack.c.l.b16 %v188
    %v958 = vunpack.c.l.b16 %v189
    %v959 = vunpack.c.l.b16 %v190
    %v960 = vunpack.c.l.b16 %v191
    %v961 = vunpack.c.l.b16 %v192
    %v962 = vunpack.c.l.b16 %v193
    %v963 = vunpack.c.l.b16 %v194
    %v964 = vunpack.c.l.b16 %v195
    %v965 = vunpack.c.l.b16 %v196
    %v966 = vunpack.c.l.b16 %v197
    %v967 = vunpack.c.l.b16 %v198
    %v968 = vunpack.c.l.b16 %v199
    %v969 = vunpack.c.l.b16 %v200
    %v970 = vunpack.c.l.b16 %v201
    %v971 = vunpack.c.l.b16 %v202
    %v972 = vunpack.c.l.b16 %v203
    %v973 = vunpack.c.l.b16 %v204
    %v974 = vunpack.c.l.b16 %v205
    %v975 = vunpack.c.l.b16 %v206
    %v976 = vunpack.c.l.b16 %v207
    %v977 = vunpack.c.l.b16 %v208
    %v978 = vunpack.c.l.b16 %v209
    %v979 = vunpack.c.l.b16 %v210
    %v980 = vunpack.c.l.b16 %v211
    %v981 = vunpack.c.l.b16 %v212
    %v982 = vunpack.c.l.b16 %v213
    %v983 = vunpack.c.l.b16 %v214
    %v984 = vunpack.c.l.b16 %v215
    %v985 = vunpack.c.l.b16 %v216
    %v986 = vunpack.c.l.b16 %v217
    %v987 = vunpack.c.l.b16 %v218
    %v988 = vunpack.c.l.b16 %v219
    %v989 = vunpack.c.l.b16 %v220
    %v990 = vunpack.c.l.b16 %v221
    %v991 = vunpack.c.l.b16 %v222
    %v992 = vunpack.c.l.b16 %v223
    %v993 = vunpack.c.l.b16 %v224
    %v994 = vunpack.c.l.b16 %v225
    %v995 = vunpack.c.l.b16 %v226
    %v996 = vunpack.c.l.b16 %v227
    %v997 = vunpack.c.l.b16 %v228
    %v998 = vunpack.c.l.b16 %v229
    %v999 = vunpack.c.l.b16 %v230
    %v1000 = vunpack.c.l.b16 %v231
    %v1001 = vunpack.c.l.b16 %v232
    %v1002 = vunpack.c.l.b16 %v233
    %v1003 = vunpack.c.l.b16 %v234
    %v1004 = vunpack.c.l.b16 %v235
    %v1005 = vunpack.c.l.b16 %v236
    %v1006 = vunpack.c.l.b16 %v237
    %v1007 = vunpack.c.l.b16 %v238
    %v1008 = vunpack.c.l.b16 %v239
    %v1009 = vunpack.c.l.b16 %v240
    %v1010 = vunpack.c.l.b16 %v241
    %v1011 = vunpack.c.l.b16 %v242
    %v1012 = vunpack.c.l.b16 %v243
    %v1013 = vunpack.c.l.b16 %v244
    %v1014 = vunpack.c.l.b16 %v245
    %v1015 = vunpack.c.l.b16 %v246
    %v1016 = vunpack.c.l.b16 %v247
    %v1017 = vunpack.c.l.b16 %v248
    %v1018 = vunpack.c.l.b16 %v249
    %v1019 = vunpack.c.l.b16 %v250
    %v1020 = vunpack.c.l.b16 %v251
    %v1021 = vunpack.c.l.b16 %v252
    %v1022 = vunpack.c.l.b16 %v253
    %v1023 = vunpack.c.l.b16 %v254
    %v1024 = vunpack.c.l.b16 %v255
    %v1025 = vunpack.c.l.b16 %v256
    %v1026 = vunpack.c.l.b16 %v257
    %v1027 = vunpack.c.l.b16 %v258
    %v1028 = vunpack.c.l.b16 %v259
    %v1029 = vunpack.c.l.b16 %v260
    %v1030 = vunpack.c.l.b16 %v261
    %v1031 = vunpack.c.l.b16 %v262
    %v1032 = vunpack.c.l.b16 %v263
    %v1033 = vunpack.c.l.b16 %v264
    %v1034 = vunpack.c.l.b16 %v265
    %v1035 = vunpack.c.l.b16 %v266
    %v1036 = vunpack.c.l.b16 %v267
    %v1037 = vunpack.c.l.b16 %v268
    %v1038 = vunpack.c.l.b16 %v269
    %v1039 = vunpack.c.l.b16 %v270
    %v1040 = vunpack.c.l.b16 %v271
    %v1041 = vunpack.c.l.b16 %v272
    %v1042 = vunpack.c.l.b16 %v273
    %v1043 = vunpack.c.l.b16 %v274
    %v1044 = vunpack.c.l.b16 %v275
    %v1045 = vunpack.c.l.b16 %v276
    %v1046 = vunpack.c.l.b16 %v277
    %v1047 = vunpack.c.l.b16 %v278
    %v1048 = vunpack.c.l.b16 %v279
    %v1049 = vunpack.c.l.b16 %v280
    %v1050 = vunpack.c.l.b16 %v281
    %v1051 = vunpack.c.l.b16 %v282
    %v1052 = vunpack.c.l.b16 %v283
    %v1053 = vunpack.c.l.b16 %v284
    %v1054 = vunpack.c.l.b16 %v285
    %v1055 = vunpack.c.l.b16 %v286
    %v1056 = vunpack.c.l.b16 %v287
    %v1057 = vunpack.c.l.b16 %v288
    %v1058 = vunpack.c.l.b16 %v289
    %v1059 = vunpack.c.l.b16 %v290
    %v1060 = vunpack.c.l.b16 %v291
    %v1061 = vunpack.c.l.b16 %v292
    %v1062 = vunpack.c.l.b16 %v293
    %v1063 = vunpack.c.l.b16 %v294
    %v1064 = vunpack.c.l.b16 %v295
    %v1065 = vunpack.c.l.b16 %v296
    %v1066 = vunpack.c.l.b16 %v297
    %v1067 = vunpack.c.l.b16 %v298
    %v1068 = vunpack.c.l.b16 %v299
    %v1069 = vunpack.c.l.b16 %v300
    %v1070 = vunpack.c.l.b16 %v301
    %v1071 = vunpack.c.l.b16 %v302
    %v1072 = vunpack.c.l.b16 %v303
    %v1073 = vunpack.c.l.b16 %v304
    %v1074 = vunpack.c.l.b16 %v305
    %v1075 = vunpack.c.l.b16 %v306
    %v1076 = vunpack.c.l.b16 %v307
    %v1077 = vunpack.c.l.b16 %v308
    %v1078 = vunpack.c.l.b16 %v309
    %v1079 = vunpack.c.l.b16 %v310
    %v1080 = vunpack.c.l.b16 %v311
    %v1081 = vunpack.c.l.b16 %v312
    %v1082 = vunpack.c.l.b16 %v313
    %v1083 = vunpack.c.l.b16 %v314
    %v1084 = vunpack.c.l.b16 %v315
    %v1085 = vunpack.c.l.b16 %v316
    %v1086 = vunpack.c.l.b16 %v317
    %v1087 = vunpack.c.l.b16 %v318
    %v1088 = vunpack.c.l.b16 %v319
    %v1089 = vunpack.c.l.b16 %v320
    %v1090 = vunpack.c.l.b16 %v321
    %v1091 = vunpack.c.l.b16 %v322
    %v1092 = vunpack.c.l.b16 %v323
    %v1093 = vunpack.c.l.b16 %v324
    %v1094 = vunpack.c.l.b16 %v325
    %v1095 = vunpack.c.l.b16 %v326
    %v1096 = vunpack.c.l.b16 %v327
    %v1097 = vunpack.c.l.b16 %v328
    %v1098 = vunpack.c.l.b16 %v329
    %v1099 = vunpack.c.l.b16 %v330
    %v1100 = vunpack.c.l.b16 %v331
    %v1101 = vunpack.c.l.b16 %v332
    %v1102 = vunpack.c.l.b16 %v333
    %v1103 = vunpack.c.l.b16 %v334
    %v1104 = vunpack.c.l.b16 %v335
    %v1105 = vunpack.c.l.b16 %v336
    %v1106 = vunpack.c.l.b16 %v337
    %v1107 = vunpack.c.l.b16 %v338
    %v1108 = vunpack.c.l.b16 %v339
    %v1109 = vunpack.c.l.b16 %v340
    %v1110 = vunpack.c.l.b16 %v341
    %v1111 = vunpack.c.l.b16 %v342
    %v1112 = vunpack.c.l.b16 %v343
    %v1113 = vunpack.c.l.b16 %v344
    %v1114 = vunpack.c.l.b16 %v345
    %v1115 = vunpack.c.l.b16 %v346
    %v1116 = vunpack.c.l.b16 %v347
    %v1117 = vunpack.c.l.b16 %v348
    %v1118 = vunpack.c.l.b16 %v349
    %v1119 = vunpack.c.l.b16 %v350
    %v1120 = vunpack.c.l.b16 %v351
    %v1121 = vunpack.c.l.b16 %v352
    %v1122 = vunpack.c.l.b16 %v353
    %v1123 = vunpack.c.l.b16 %v354
    %v1124 = vunpack.c.l.b16 %v355
    %v1125 = vunpack.c.l.b16 %v356
    %v1126 = vunpack.c.l.b16 %v357
    %v1127 = vunpack.c.l.b16 %v358
    %v1128 = vunpack.c.l.b16 %v359
    %v1129 = vunpack.c.l.b16 %v360
    %v1130 = vunpack.c.l.b16 %v361
    %v1131 = vunpack.c.l.b16 %v362
    %v1132 = vunpack.c.l.b16 %v363
    %v1133 = vunpack.c.l.b16 %v364
    %v1134 = vunpack.c.l.b16 %v365
    %v1135 = vunpack.c.l.b16 %v366
    %v1136 = vunpack.c.l.b16 %v367
    %v1137 = vunpack.c.l.b16 %v368
    %v1138 = vunpack.c.l.b16 %v369
    %v1139 = vunpack.c.l.b16 %v370
    %v1140 = vunpack.c.l.b16 %v371
    %v1141 = vunpack.c.l.b16 %v372
    %v1142 = vunpack.c.l.b16 %v373
    %v1143 = vunpack.c.l.b16 %v374
    %v1144 = vunpack.c.l.b16 %v375
    %v1145 = vunpack.c.l.b16 %v376
    %v1146 = vunpack.c.l.b16 %v377
    %v1147 = vunpack.c.l.b16 %v378
    %v1148 = vunpack.c.l.b16 %v379
    %v1149 = vunpack.c.l.b16 %v380
    %v1150 = vunpack.c.l.b16 %v381
    %v1151 = vunpack.c.l.b16 %v382
    %v1152 = vunpack.c.l.b16 %v383
    %v1153 = vunpack.c.l.b16 %v384
    %v1154 = vunpack.c.l.b16 %v385
    %v1155 = vunpack.c.l.b16 %v386
    %v1156 = vunpack.c.l.b16 %v387
    %v1157 = vunpack.c.l.b16 %v388
    %v1158 = vunpack.c.l.b16 %v389
    %v1159 = vunpack.c.l.b16 %v390
    %v1160 = vunpack.c.l.b16 %v391
    %v1161 = vunpack.c.l.b16 %v392
    %v1162 = vunpack.c.l.b16 %v393
    %v1163 = vunpack.c.l.b16 %v394
    %v1164 = vunpack.c.l.b16 %v395
    %v1165 = vunpack.c.l.b16 %v396
    %v1166 = vunpack.c.l.b16 %v397
    %v1167 = vunpack.c.l.b16 %v398
    %v1168 = vunpack.c.l.b16 %v399
    %v1169 = vunpack.c.l.b16 %v400
    %v1170 = vunpack.c.l.b16 %v401
    %v1171 = vunpack.c.l.b16 %v402
    %v1172 = vunpack.c.l.b16 %v403
    %v1173 = vunpack.c.l.b16 %v404
    %v1174 = vunpack.c.l.b16 %v405
    %v1175 = vunpack.c.l.b16 %v406
    %v1176 = vunpack.c.l.b16 %v407
    %v1177 = vunpack.c.l.b16 %v408
    %v1178 = vunpack.c.l.b16 %v409
    %v1179 = vunpack.c.l.b16 %v410
    %v1180 = vunpack.c.l.b16 %v411
    %v1181 = vunpack.c.l.b16 %v412
    %v1182 = vunpack.c.l.b16 %v413
    %v1183 = vunpack.c.l.b16 %v414
    %v1184 = vunpack.c.l.b16 %v415
    %v1185 = vunpack.c.l.b16 %v416
    %v1186 = vunpack.c.l.b16 %v417
    %v1187 = vunpack.c.l.b16 %v418
    %v1188 = vunpack.c.l.b16 %v419
    %v1189 = vunpack.c.l.b16 %v420
    %v1190 = vunpack.c.l.b16 %v421
    %v1191 = vunpack.c.l.b16 %v422
    %v1192 = vunpack.c.l.b16 %v423
    %v1193 = vunpack.c.l.b16 %v424
    %v1194 = vunpack.c.l.b16 %v425
    %v1195 = vunpack.c.l.b16 %v426
    %v1196 = vunpack.c.l.b16 %v427
    %v1197 = vunpack.c.l.b16 %v428
    %v1198 = vunpack.c.l.b16 %v429
    %v1199 = vunpack.c.l.b16 %v430
    %v1200 = vunpack.c.l.b16 %v431
    %v1201 = vunpack.c.l.b16 %v432
    %v1202 = vunpack.c.l.b16 %v433
    %v1203 = vunpack.c.l.b16 %v434
    %v1204 = vunpack.c.l.b16 %v435
    %v1205 = vunpack.c.l.b16 %v436
    %v1206 = vunpack.c.l.b16 %v437
    %v1207 = vunpack.c.l.b16 %v438
    %v1208 = vunpack.c.l.b16 %v439
    %v1209 = vunpack.c.l.b16 %v440
    %v1210 = vunpack.c.l.b16 %v441
    %v1211 = vunpack.c.l.b16 %v442
    %v1212 = vunpack.c.l.b16 %v443
    %v1213 = vunpack.c.l.b16 %v444
    %v1214 = vunpack.c.l.b16 %v445
    %v1215 = vunpack.c.l.b16 %v446
    %v1216 = vunpack.c.l.b16 %v447
    %v1217 = vunpack.c.l.b16 %v448
    %v1218 = vunpack.c.l.b16 %v449
    %v1219 = vunpack.c.l.b16 %v450
    %v1220 = vunpack.c.l.b16 %v451
    %v1221 = vunpack.c.l.b16 %v452
    %v1222 = vunpack.c.l.b16 %v453
    %v1223 = vunpack.c.l.b16 %v454
    %v1224 = vunpack.c.l.b16 %v455
    %v1225 = vunpack.c.l.b16 %v456
    %v1226 = vunpack.c.l.b16 %v457
    %v1227 = vpack.c.b16 %v844, %v843
    %v1228 = vpack.c.b16 %v846, %v845
    %v1229 = vpack.c.b16 %v848, %v847
    %v1230 = vpack.c.b16 %v850, %v849
    %v1231 = vpack.c.b16 %v852, %v851
    %v1232 = vpack.c.b16 %v854, %v853
    %v1233 = vpack.c.b16 %v856, %v855
    %v1234 = vpack.c.b16 %v858, %v857
    %v1235 = vpack.c.b16 %v860, %v859
    %v1236 = vpack.c.b16 %v862, %v861
    %v1237 = vpack.c.b16 %v864, %v863
    %v1238 = vpack.c.b16 %v866, %v865
    %v1239 = vpack.c.b16 %v868, %v867
    %v1240 = vpack.c.b16 %v870, %v869
    %v1241 = vpack.c.b16 %v872, %v871
    %v1242 = vpack.c.b16 %v874, %v873
    %v1243 = vpack.c.b16 %v876, %v875
    %v1244 = vpack.c.b16 %v878, %v877
    %v1245 = vpack.c.b16 %v880, %v879
    %v1246 = vpack.c.b16 %v882, %v881
    %v1247 = vpack.c.b16 %v884, %v883
    %v1248 = vpack.c.b16 %v886, %v885
    %v1249 = vpack.c.b16 %v888, %v887
    %v1250 = vpack.c.b16 %v890, %v889
    %v1251 = vpack.c.b16 %v892, %v891
    %v1252 = vpack.c.b16 %v894, %v893
    %v1253 = vpack.c.b16 %v896, %v895
    %v1254 = vpack.c.b16 %v898, %v897
    %v1255 = vpack.c.b16 %v900, %v899
    %v1256 = vpack.c.b16 %v902, %v901
    %v1257 = vpack.c.b16 %v904, %v903
    %v1258 = vpack.c.b16 %v906, %v905
    %v1259 = vpack.c.b16 %v908, %v907
    %v1260 = vpack.c.b16 %v910, %v909
    %v1261 = vpack.c.b16 %v912, %v911
    %v1262 = vpack.c.b16 %v914, %v913
    %v1263 = vpack.c.b16 %v916, %v915
    %v1264 = vpack.c.b16 %v918, %v917
    %v1265 = vpack.c.b16 %v920, %v919
    %v1266 = vpack.c.b16 %v922, %v921
    %v1267 = vpack.c.b16 %v924, %v923
    %v1268 = vpack.c.b16 %v926, %v925
    %v1269 = vpack.c.b16 %v928, %v927
    %v1270 = vpack.c.b16 %v930, %v929
    %v1271 = vpack.c.b16 %v932, %v931
    %v1272 = vpack.c.b16 %v934, %v933
    %v1273 = vpack.c.b16 %v936, %v935
    %v1274 = vpack.c.b16 %v938, %v937
    %v1275 = vpack.c.b16 %v940, %v939
    %v1276 = vpack.c.b16 %v942, %v941
    %v1277 = vpack.c.b16 %v944, %v943
    %v1278 = vpack.c.b16 %v946, %v945
    %v1279 = vpack.c.b16 %v948, %v947
    %v1280 = vpack.c.b16 %v950, %v949
    %v1281 = vpack.c.b16 %v952, %v951
    %v1282 = vpack.c.b16 %v954, %v953
    %v1283 = vpack.c.b16 %v956, %v955
    %v1284 = vpack.c.b16 %v958, %v957
    %v1285 = vpack.c.b16 %v960, %v959
    %v1286 = vpack.c.b16 %v962, %v961
    %v1287 = vpack.c.b16 %v964, %v963
    %v1288 = vpack.c.b16 %v966, %v965
    %v1289 = vpack.c.b16 %v968, %v967
    %v1290 = vpack.c.b16 %v970, %v969
    %v1291 = vpack.c.b16 %v972, %v971
    %v1292 = vpack.c.b16 %v974, %v973
    %v1293 = vpack.c.b16 %v976, %v975
    %v1294 = vpack.c.b16 %v978, %v977
    %v1295 = vpack.c.b16 %v980, %v979
    %v1296 = vpack.c.b16 %v982, %v981
    %v1297 = vpack.c.b16 %v984, %v983
    %v1298 = vpack.c.b16 %v986, %v985
    %v1299 = vpack.c.b16 %v988, %v987
    %v1300 = vpack.c.b16 %v990, %v989
    %v1301 = vpack.c.b16 %v992, %v991
    %v1302 = vpack.c.b16 %v994, %v993
    %v1303 = vpack.c.b16 %v996, %v995
    %v1304 = vpack.c.b16 %v998, %v997
    %v1305 = vpack.c.b16 %v1000, %v999
    %v1306 = vpack.c.b16 %v1002, %v1001
    %v1307 = vpack.c.b16 %v1004, %v1003
    %v1308 = vpack.c.b16 %v1006, %v1005
    %v1309 = vpack.c.b16 %v1008, %v1007
    %v1310 = vpack.c.b16 %v1010, %v1009
    %v1311 = vpack.c.b16 %v1012, %v1011
    %v1312 = vpack.c.b16 %v1014, %v1013
    %v1313 = vpack.c.b16 %v1016, %v1015
    %v1314 = vpack.c.b16 %v1018, %v1017
    %v1315 = vpack.c.b16 %v1020, %v1019
    %v1316 = vpack.c.b16 %v1022, %v1021
    %v1317 = vpack.c.b16 %v1024, %v1023
    %v1318 = vpack.c.b16 %v1026, %v1025
    %v1319 = vpack.c.b16 %v1028, %v1027
    %v1320 = vpack.c.b16 %v1030, %v1029
    %v1321 = vpack.c.b16 %v1032, %v1031
    %v1322 = vpack.c.b16 %v1034, %v1033
    %v1323 = vpack.c.b16 %v1036, %v1035
    %v1324 = vpack.c.b16 %v1038, %v1037
    %v1325 = vpack.c.b16 %v1040, %v1039
    %v1326 = vpack.c.b16 %v1042, %v1041
    %v1327 = vpack.c.b16 %v1044, %v1043
    %v1328 = vpack.c.b16 %v1046, %v1045
    %v1329 = vpack.c.b16 %v1048, %v1047
    %v1330 = vpack.c.b16 %v1050, %v1049
    %v1331 = vpack.c.b16 %v1052, %v1051
    %v1332 = vpack.c.b16 %v1054, %v1053
    %v1333 = vpack.c.b16 %v1056, %v1055
    %v1334 = vpack.c.b16 %v1058, %v1057
    %v1335 = vpack.c.b16 %v1060, %v1059
    %v1336 = vpack.c.b16 %v1062, %v1061
    %v1337 = vpack.c.b16 %v1064, %v1063
    %v1338 = vpack.c.b16 %v1066, %v1065
    %v1339 = vpack.c.b16 %v1068, %v1067
    %v1340 = vpack.c.b16 %v1070, %v1069
    %v1341 = vpack.c.b16 %v1072, %v1071
    %v1342 = vpack.c.b16 %v1074, %v1073
    %v1343 = vpack.c.b16 %v1076, %v1075
    %v1344 = vpack.c.b16 %v1078, %v1077
    %v1345 = vpack.c.b16 %v1080, %v1079
    %v1346 = vpack.c.b16 %v1082, %v1081
    %v1347 = vpack.c.b16 %v1084, %v1083
    %v1348 = vpack.c.b16 %v1086, %v1085
    %v1349 = vpack.c.b16 %v1088, %v1087
    %v1350 = vpack.c.b16 %v1090, %v1089
    %v1351 = vpack.c.b16 %v1092, %v1091
    %v1352 = vpack.c.b16 %v1094, %v1093
    %v1353 = vpack.c.b16 %v1096, %v1095
    %v1354 = vpack.c.b16 %v1098, %v1097
    %v1355 = vpack.c.b16 %v1100, %v1099
    %v1356 = vpack.c.b16 %v1102, %v1101
    %v1357 = vpack.c.b16 %v1104, %v1103
    %v1358 = vpack.c.b16 %v1106, %v1105
    %v1359 = vpack.c.b16 %v1108, %v1107
    %v1360 = vpack.c.b16 %v1110, %v1109
    %v1361 = vpack.c.b16 %v1112, %v1111
    %v1362 = vpack.c.b16 %v1114, %v1113
    %v1363 = vpack.c.b16 %v1116, %v1115
    %v1364 = vpack.c.b16 %v1118, %v1117
    %v1365 = vpack.c.b16 %v1120, %v1119
    %v1366 = vpack.c.b16 %v1122, %v1121
    %v1367 = vpack.c.b16 %v1124, %v1123
    %v1368 = vpack.c.b16 %v1126, %v1125
    %v1369 = vpack.c.b16 %v1128, %v1127
    %v1370 = vpack.c.b16 %v1130, %v1129
    %v1371 = vpack.c.b16 %v1132, %v1131
    %v1372 = vpack.c.b16 %v1134, %v1133
    %v1373 = vpack.c.b16 %v1136, %v1135
    %v1374 = vpack.c.b16 %v1138, %v1137
    %v1375 = vpack.c.b16 %v1140, %v1139
    %v1376 = vpack.c.b16 %v1142, %v1141
    %v1377 = vpack.c.b16 %v1144, %v1143
    %v1378 = vpack.c.b16 %v1146, %v1145
    %v1379 = vpack.c.b16 %v1148, %v1147
    %v1380 = vpack.c.b16 %v1150, %v1149
    %v1381 = vpack.c.b16 %v1152, %v1151
    %v1382 = vpack.c.b16 %v1154, %v1153
    %v1383 = vpack.c.b16 %v1156, %v1155
    %v1384 = vpack.c.b16 %v1158, %v1157
    %v1385 = vpack.c.b16 %v1160, %v1159
    %v1386 = vpack.c.b16 %v1162, %v1161
    %v1387 = vpack.c.b16 %v1164, %v1163
    %v1388 = vpack.c.b16 %v1166, %v1165
    %v1389 = vpack.c.b16 %v1168, %v1167
    %v1390 = vpack.c.b16 %v1170, %v1169
    %v1391 = vpack.c.b16 %v1172, %v1171
    %v1392 = vpack.c.b16 %v1174, %v1173
    %v1393 = vpack.c.b16 %v1176, %v1175
    %v1394 = vpack.c.b16 %v1178, %v1177
    %v1395 = vpack.c.b16 %v1180, %v1179
    %v1396 = vpack.c.b16 %v1182, %v1181
    %v1397 = vpack.c.b16 %v1184, %v1183
    %v1398 = vpack.c.b16 %v1186, %v1185
    %v1399 = vpack.c.b16 %v1188, %v1187
    %v1400 = vpack.c.b16 %v1190, %v1189
    %v1401 = vpack.c.b16 %v1192, %v1191
    %v1402 = vpack.c.b16 %v1194, %v1193
    %v1403 = vpack.c.b16 %v1196, %v1195
    %v1404 = vpack.c.b16 %v1198, %v1197
    %v1405 = vpack.c.b16 %v1200, %v1199
    %v1406 = vpack.c.b16 %v1202, %v1201
    %v1407 = vpack.c.b16 %v1204, %v1203
    %v1408 = vpack.c.b16 %v1206, %v1205
    %v1409 = vpack.c.b16 %v1208, %v1207
    %v1410 = vpack.c.b16 %v1210, %v1209
    %v1411 = vpack.c.b16 %v1212, %v1211
    %v1412 = vpack.c.b16 %v1214, %v1213
    %v1413 = vpack.c.b16 %v1216, %v1215
    %v1414 = vpack.c.b16 %v1218, %v1217
    %v1415 = vpack.c.b16 %v1220, %v1219
    %v1416 = vpack.c.b16 %v1222, %v1221
    %v1417 = vpack.c.b16 %v1224, %v1223
    %v1418 = vpack.c.b16 %v1226, %v1225
    %1611 = vmatpush.bf16.msra.mxu0 %v1234
    %1612 = vmatpush.bf16.msra.mxu0 %v1233
    %1613 = vmatpush.bf16.msra.mxu0 %v1232
    %1614 = vmatpush.bf16.msra.mxu0 %v1231
    %1615 = vmatpush.bf16.msra.mxu0 %v1230
    %1616 = vmatpush.bf16.msra.mxu0 %v1229
    %1617 = vmatpush.bf16.msra.mxu0 %v1228
    %1618 = vmatpush.bf16.msra.mxu0 %v1227
    %1619 = vmatmul.bf16.gmra.mxu0 %v50
    %v1620 = vpop.f32.mrf.mxu0
    %v1621 = vadd.f32 %v458, %v1620
    %v1622 = vpop.f32.mrf.mxu0
    %1623 = vdwg.mxu0
    %1624 = vmatpush.bf16.msra.mxu0 %v1242
    %1625 = vmatpush.bf16.msra.mxu0 %v1241
    %1626 = vmatpush.bf16.msra.mxu0 %v1240
    %1627 = vmatpush.bf16.msra.mxu0 %v1239
    %1628 = vmatpush.bf16.msra.mxu0 %v1238
    %1629 = vmatpush.bf16.msra.mxu0 %v1237
    %1630 = vmatpush.bf16.msra.mxu0 %v1236
    %1631 = vmatpush.bf16.msra.mxu0 %v1235
    %1632 = vmatmul.bf16.gmra.mxu0 %v51
    %v1633 = vpop.f32.mrf.mxu0
    %v1634 = vadd.f32 %v1621, %v1633
    %v1635 = vpop.f32.mrf.mxu0
    %1636 = vdwg.mxu0
    %1637 = vmatpush.bf16.msra.mxu0 %v1250
    %1638 = vmatpush.bf16.msra.mxu0 %v1249
    %1639 = vmatpush.bf16.msra.mxu0 %v1248
    %1640 = vmatpush.bf16.msra.mxu0 %v1247
    %1641 = vmatpush.bf16.msra.mxu0 %v1246
    %1642 = vmatpush.bf16.msra.mxu0 %v1245
    %1643 = vmatpush.bf16.msra.mxu0 %v1244
    %1644 = vmatpush.bf16.msra.mxu0 %v1243
    %1645 = vmatmul.bf16.gmra.mxu0 %v52
    %v1646 = vpop.f32.mrf.mxu0
    %v1647 = vadd.f32 %v1634, %v1646
    %v1648 = vpop.f32.mrf.mxu0
    %1649 = vdwg.mxu0
    %1650 = vmatpush.bf16.msra.mxu0 %v1258
    %1651 = vmatpush.bf16.msra.mxu0 %v1257
    %1652 = vmatpush.bf16.msra.mxu0 %v1256
    %1653 = vmatpush.bf16.msra.mxu0 %v1255
    %1654 = vmatpush.bf16.msra.mxu0 %v1254
    %1655 = vmatpush.bf16.msra.mxu0 %v1253
    %1656 = vmatpush.bf16.msra.mxu0 %v1252
    %1657 = vmatpush.bf16.msra.mxu0 %v1251
    %1658 = vmatmul.bf16.gmra.mxu0 %v53
    %v1659 = vpop.f32.mrf.mxu0
    %v1660 = vadd.f32 %v1647, %v1659
    %v1661 = vpop.f32.mrf.mxu0
    %1662 = vdwg.mxu0
    %1663 = vmatpush.bf16.msra.mxu0 %v1266
    %1664 = vmatpush.bf16.msra.mxu0 %v1265
    %1665 = vmatpush.bf16.msra.mxu0 %v1264
    %1666 = vmatpush.bf16.msra.mxu0 %v1263
    %1667 = vmatpush.bf16.msra.mxu0 %v1262
    %1668 = vmatpush.bf16.msra.mxu0 %v1261
    %1669 = vmatpush.bf16.msra.mxu0 %v1260
    %1670 = vmatpush.bf16.msra.mxu0 %v1259
    %1671 = vmatmul.bf16.gmra.mxu0 %v54
    %v1672 = vpop.f32.mrf.mxu0
    %v1673 = vadd.f32 %v1660, %v1672
    %v1674 = vpop.f32.mrf.mxu0
    %1675 = vdwg.mxu0
    %1676 = vmatpush.bf16.msra.mxu0 %v1274
    %1677 = vmatpush.bf16.msra.mxu0 %v1273
    %1678 = vmatpush.bf16.msra.mxu0 %v1272
    %1679 = vmatpush.bf16.msra.mxu0 %v1271
    %1680 = vmatpush.bf16.msra.mxu0 %v1270
    %1681 = vmatpush.bf16.msra.mxu0 %v1269
    %1682 = vmatpush.bf16.msra.mxu0 %v1268
    %1683 = vmatpush.bf16.msra.mxu0 %v1267
    %1684 = vmatmul.bf16.gmra.mxu0 %v55
    %v1685 = vpop.f32.mrf.mxu0
    %v1686 = vadd.f32 %v1673, %v1685
    %v1687 = vpop.f32.mrf.mxu0
    %1688 = vdwg.mxu0
    %1689 = vmatpush.bf16.msra.mxu0 %v1282
    %1690 = vmatpush.bf16.msra.mxu0 %v1281
    %1691 = vmatpush.bf16.msra.mxu0 %v1280
    %1692 = vmatpush.bf16.msra.mxu0 %v1279
    %1693 = vmatpush.bf16.msra.mxu0 %v1278
    %1694 = vmatpush.bf16.msra.mxu0 %v1277
    %1695 = vmatpush.bf16.msra.mxu0 %v1276
    %1696 = vmatpush.bf16.msra.mxu0 %v1275
    %1697 = vmatmul.bf16.gmra.mxu0 %v56
    %v1698 = vpop.f32.mrf.mxu0
    %v1699 = vadd.f32 %v1686, %v1698
    %v1700 = vpop.f32.mrf.mxu0
    %1701 = vdwg.mxu0
    %1702 = vmatpush.bf16.msra.mxu0 %v1290
    %1703 = vmatpush.bf16.msra.mxu0 %v1289
    %1704 = vmatpush.bf16.msra.mxu0 %v1288
    %1705 = vmatpush.bf16.msra.mxu0 %v1287
    %1706 = vmatpush.bf16.msra.mxu0 %v1286
    %1707 = vmatpush.bf16.msra.mxu0 %v1285
    %1708 = vmatpush.bf16.msra.mxu0 %v1284
    %1709 = vmatpush.bf16.msra.mxu0 %v1283
    %1710 = vmatmul.bf16.gmra.mxu0 %v57
    %v1711 = vpop.f32.mrf.mxu0
    %v1712 = vadd.f32 %v1699, %v1711
    %v1713 = vpop.f32.mrf.mxu0
    %1714 = vdwg.mxu0
    %1715 = vmatpush.bf16.msra.mxu0 %v1298
    %1716 = vmatpush.bf16.msra.mxu0 %v1297
    %1717 = vmatpush.bf16.msra.mxu0 %v1296
    %1718 = vmatpush.bf16.msra.mxu0 %v1295
    %1719 = vmatpush.bf16.msra.mxu0 %v1294
    %1720 = vmatpush.bf16.msra.mxu0 %v1293
    %1721 = vmatpush.bf16.msra.mxu0 %v1292
    %1722 = vmatpush.bf16.msra.mxu0 %v1291
    %1723 = vmatmul.bf16.gmra.mxu0 %v58
    %v1724 = vpop.f32.mrf.mxu0
    %v1725 = vadd.f32 %v1712, %v1724
    %v1726 = vpop.f32.mrf.mxu0
    %1727 = vdwg.mxu0
    %1728 = vmatpush.bf16.msra.mxu0 %v1306
    %1729 = vmatpush.bf16.msra.mxu0 %v1305
    %1730 = vmatpush.bf16.msra.mxu0 %v1304
    %1731 = vmatpush.bf16.msra.mxu0 %v1303
    %1732 = vmatpush.bf16.msra.mxu0 %v1302
    %1733 = vmatpush.bf16.msra.mxu0 %v1301
    %1734 = vmatpush.bf16.msra.mxu0 %v1300
    %1735 = vmatpush.bf16.msra.mxu0 %v1299
    %1736 = vmatmul.bf16.gmra.mxu0 %v59
    %v1737 = vpop.f32.mrf.mxu0
    %v1738 = vadd.f32 %v1725, %v1737
    %v1739 = vpop.f32.mrf.mxu0
    %1740 = vdwg.mxu0
    %1741 = vmatpush.bf16.msra.mxu0 %v1314
    %1742 = vmatpush.bf16.msra.mxu0 %v1313
    %1743 = vmatpush.bf16.msra.mxu0 %v1312
    %1744 = vmatpush.bf16.msra.mxu0 %v1311
    %1745 = vmatpush.bf16.msra.mxu0 %v1310
    %1746 = vmatpush.bf16.msra.mxu0 %v1309
    %1747 = vmatpush.bf16.msra.mxu0 %v1308
    %1748 = vmatpush.bf16.msra.mxu0 %v1307
    %1749 = vmatmul.bf16.gmra.mxu0 %v60
    %v1750 = vpop.f32.mrf.mxu0
    %v1751 = vadd.f32 %v1738, %v1750
    %v1752 = vpop.f32.mrf.mxu0
    %1753 = vdwg.mxu0
    %1754 = vmatpush.bf16.msra.mxu0 %v1322
    %1755 = vmatpush.bf16.msra.mxu0 %v1321
    %1756 = vmatpush.bf16.msra.mxu0 %v1320
    %1757 = vmatpush.bf16.msra.mxu0 %v1319
    %1758 = vmatpush.bf16.msra.mxu0 %v1318
    %1759 = vmatpush.bf16.msra.mxu0 %v1317
    %1760 = vmatpush.bf16.msra.mxu0 %v1316
    %1761 = vmatpush.bf16.msra.mxu0 %v1315
    %1762 = vmatmul.bf16.gmra.mxu0 %v61
    %v1763 = vpop.f32.mrf.mxu0
    %v1764 = vadd.f32 %v1751, %v1763
    %v1765 = vpop.f32.mrf.mxu0
    %1766 = vdwg.mxu0
    %1767 = vmatpush.bf16.msra.mxu0 %v1330
    %1768 = vmatpush.bf16.msra.mxu0 %v1329
    %1769 = vmatpush.bf16.msra.mxu0 %v1328
    %1770 = vmatpush.bf16.msra.mxu0 %v1327
    %1771 = vmatpush.bf16.msra.mxu0 %v1326
    %1772 = vmatpush.bf16.msra.mxu0 %v1325
    %1773 = vmatpush.bf16.msra.mxu0 %v1324
    %1774 = vmatpush.bf16.msra.mxu0 %v1323
    %1775 = vmatmul.bf16.gmra.mxu0 %v62
    %v1776 = vpop.f32.mrf.mxu0
    %v1777 = vadd.f32 %v1764, %v1776
    %v1778 = vpop.f32.mrf.mxu0
    %1779 = vdwg.mxu0
    %1780 = vmatpush.bf16.msra.mxu0 %v1338
    %1781 = vmatpush.bf16.msra.mxu0 %v1337
    %1782 = vmatpush.bf16.msra.mxu0 %v1336
    %1783 = vmatpush.bf16.msra.mxu0 %v1335
    %1784 = vmatpush.bf16.msra.mxu0 %v1334
    %1785 = vmatpush.bf16.msra.mxu0 %v1333
    %1786 = vmatpush.bf16.msra.mxu0 %v1332
    %1787 = vmatpush.bf16.msra.mxu0 %v1331
    %1788 = vmatmul.bf16.gmra.mxu0 %v63
    %v1789 = vpop.f32.mrf.mxu0
    %v1790 = vadd.f32 %v1777, %v1789
    %v1791 = vpop.f32.mrf.mxu0
    %1792 = vdwg.mxu0
    %1793 = vmatpush.bf16.msra.mxu0 %v1346
    %1794 = vmatpush.bf16.msra.mxu0 %v1345
    %1795 = vmatpush.bf16.msra.mxu0 %v1344
    %1796 = vmatpush.bf16.msra.mxu0 %v1343
    %1797 = vmatpush.bf16.msra.mxu0 %v1342
    %1798 = vmatpush.bf16.msra.mxu0 %v1341
    %1799 = vmatpush.bf16.msra.mxu0 %v1340
    %1800 = vmatpush.bf16.msra.mxu0 %v1339
    %1801 = vmatmul.bf16.gmra.mxu0 %v64
    %v1802 = vpop.f32.mrf.mxu0
    %v1803 = vadd.f32 %v1790, %v1802
    %v1804 = vpop.f32.mrf.mxu0
    %1805 = vdwg.mxu0
    %1806 = vmatpush.bf16.msra.mxu0 %v1354
    %1807 = vmatpush.bf16.msra.mxu0 %v1353
    %1808 = vmatpush.bf16.msra.mxu0 %v1352
    %1809 = vmatpush.bf16.msra.mxu0 %v1351
    %1810 = vmatpush.bf16.msra.mxu0 %v1350
    %1811 = vmatpush.bf16.msra.mxu0 %v1349
    %1812 = vmatpush.bf16.msra.mxu0 %v1348
    %1813 = vmatpush.bf16.msra.mxu0 %v1347
    %1814 = vmatmul.bf16.gmra.mxu0 %v65
    %v1815 = vpop.f32.mrf.mxu0
    %v1816 = vadd.f32 %v1803, %v1815
    %v1817 = vpop.f32.mrf.mxu0
    %1818 = vdwg.mxu0
    %1819 = vmatpush.bf16.msra.mxu0 %v1362
    %1820 = vmatpush.bf16.msra.mxu0 %v1361
    %1821 = vmatpush.bf16.msra.mxu0 %v1360
    %1822 = vmatpush.bf16.msra.mxu0 %v1359
    %1823 = vmatpush.bf16.msra.mxu0 %v1358
    %1824 = vmatpush.bf16.msra.mxu0 %v1357
    %1825 = vmatpush.bf16.msra.mxu0 %v1356
    %1826 = vmatpush.bf16.msra.mxu0 %v1355
    %1827 = vmatmul.bf16.gmra.mxu0 %v66
    %v1828 = vpop.f32.mrf.mxu0
    %v1829 = vadd.f32 %v1816, %v1828
    %v1830 = vpop.f32.mrf.mxu0
    %1831 = vdwg.mxu0
    %1832 = vmatpush.bf16.msra.mxu0 %v1370
    %1833 = vmatpush.bf16.msra.mxu0 %v1369
    %1834 = vmatpush.bf16.msra.mxu0 %v1368
    %1835 = vmatpush.bf16.msra.mxu0 %v1367
    %1836 = vmatpush.bf16.msra.mxu0 %v1366
    %1837 = vmatpush.bf16.msra.mxu0 %v1365
    %1838 = vmatpush.bf16.msra.mxu0 %v1364
    %1839 = vmatpush.bf16.msra.mxu0 %v1363
    %1840 = vmatmul.bf16.gmra.mxu0 %v67
    %v1841 = vpop.f32.mrf.mxu0
    %v1842 = vadd.f32 %v1829, %v1841
    %v1843 = vpop.f32.mrf.mxu0
    %1844 = vdwg.mxu0
    %1845 = vmatpush.bf16.msra.mxu0 %v1378
    %1846 = vmatpush.bf16.msra.mxu0 %v1377
    %1847 = vmatpush.bf16.msra.mxu0 %v1376
    %1848 = vmatpush.bf16.msra.mxu0 %v1375
    %1849 = vmatpush.bf16.msra.mxu0 %v1374
    %1850 = vmatpush.bf16.msra.mxu0 %v1373
    %1851 = vmatpush.bf16.msra.mxu0 %v1372
    %1852 = vmatpush.bf16.msra.mxu0 %v1371
    %1853 = vmatmul.bf16.gmra.mxu0 %v68
    %v1854 = vpop.f32.mrf.mxu0
    %v1855 = vadd.f32 %v1842, %v1854
    %v1856 = vpop.f32.mrf.mxu0
    %1857 = vdwg.mxu0
    %1858 = vmatpush.bf16.msra.mxu0 %v1386
    %1859 = vmatpush.bf16.msra.mxu0 %v1385
    %1860 = vmatpush.bf16.msra.mxu0 %v1384
    %1861 = vmatpush.bf16.msra.mxu0 %v1383
    %1862 = vmatpush.bf16.msra.mxu0 %v1382
    %1863 = vmatpush.bf16.msra.mxu0 %v1381
    %1864 = vmatpush.bf16.msra.mxu0 %v1380
    %1865 = vmatpush.bf16.msra.mxu0 %v1379
    %1866 = vmatmul.bf16.gmra.mxu0 %v69
    %v1867 = vpop.f32.mrf.mxu0
    %v1868 = vadd.f32 %v1855, %v1867
    %v1869 = vpop.f32.mrf.mxu0
    %1870 = vdwg.mxu0
    %1871 = vmatpush.bf16.msra.mxu0 %v1394
    %1872 = vmatpush.bf16.msra.mxu0 %v1393
    %1873 = vmatpush.bf16.msra.mxu0 %v1392
    %1874 = vmatpush.bf16.msra.mxu0 %v1391
    %1875 = vmatpush.bf16.msra.mxu0 %v1390
    %1876 = vmatpush.bf16.msra.mxu0 %v1389
    %1877 = vmatpush.bf16.msra.mxu0 %v1388
    %1878 = vmatpush.bf16.msra.mxu0 %v1387
    %1879 = vmatmul.bf16.gmra.mxu0 %v70
    %v1880 = vpop.f32.mrf.mxu0
    %v1881 = vadd.f32 %v1868, %v1880
    %v1882 = vpop.f32.mrf.mxu0
    %1883 = vdwg.mxu0
    %1884 = vmatpush.bf16.msra.mxu0 %v1402
    %1885 = vmatpush.bf16.msra.mxu0 %v1401
    %1886 = vmatpush.bf16.msra.mxu0 %v1400
    %1887 = vmatpush.bf16.msra.mxu0 %v1399
    %1888 = vmatpush.bf16.msra.mxu0 %v1398
    %1889 = vmatpush.bf16.msra.mxu0 %v1397
    %1890 = vmatpush.bf16.msra.mxu0 %v1396
    %1891 = vmatpush.bf16.msra.mxu0 %v1395
    %1892 = vmatmul.bf16.gmra.mxu0 %v71
    %v1893 = vpop.f32.mrf.mxu0
    %v1894 = vadd.f32 %v1881, %v1893
    %v1895 = vpop.f32.mrf.mxu0
    %1896 = vdwg.mxu0
    %1897 = vmatpush.bf16.msra.mxu0 %v1410
    %1898 = vmatpush.bf16.msra.mxu0 %v1409
    %1899 = vmatpush.bf16.msra.mxu0 %v1408
    %1900 = vmatpush.bf16.msra.mxu0 %v1407
    %1901 = vmatpush.bf16.msra.mxu0 %v1406
    %1902 = vmatpush.bf16.msra.mxu0 %v1405
    %1903 = vmatpush.bf16.msra.mxu0 %v1404
    %1904 = vmatpush.bf16.msra.mxu0 %v1403
    %1905 = vmatmul.bf16.gmra.mxu0 %v72
    %v1906 = vpop.f32.mrf.mxu0
    %v1907 = vadd.f32 %v1894, %v1906
    %v1908 = vpop.f32.mrf.mxu0
    %1909 = vdwg.mxu0
    %1910 = vmatpush.bf16.msra.mxu0 %v1418
    %1911 = vmatpush.bf16.msra.mxu0 %v1417
    %1912 = vmatpush.bf16.msra.mxu0 %v1416
    %1913 = vmatpush.bf16.msra.mxu0 %v1415
    %1914 = vmatpush.bf16.msra.mxu0 %v1414
    %1915 = vmatpush.bf16.msra.mxu0 %v1413
    %1916 = vmatpush.bf16.msra.mxu0 %v1412
    %1917 = vmatpush.bf16.msra.mxu0 %v1411
    %1918 = vmatmul.bf16.gmra.mxu0 %v73
    %v1919 = vpop.f32.mrf.mxu0
    %v1920 = vadd.f32 %v1907, %v1919
    %v1921 = vpop.f32.mrf.mxu0
    %1922 = vdwg.mxu0
    %v1923 = vmax.f32 %v1920, 0.0
    %v1924 = vpack.c.bf16 %v1923, %v1923
    %v1925 = vld [vmem:[%s2] sm:$0xf]
    %v1926 = vld [vmem:[%s2 + $0x4] sm:$0xf]
    %v1927 = vld [vmem:[%s2 + $0x8] sm:$0xf]
    %v1928 = vld [vmem:[%s2 + $0xc] sm:$0xf]
    %v1929 = vld [vmem:[%s2 + $0x10] sm:$0xf]
    %v1930 = vld [vmem:[%s2 + $0x14] sm:$0xf]
    %v1931 = vld [vmem:[%s2 + $0x18] sm:$0xf]
    %v1932 = vld [vmem:[%s2 + $0x1c] sm:$0xf]
    %v1933 = vperm.slane %v25, 1
    %v1942 = vunpack.c.l.b16 %v1925
    %v1943 = vunpack.c.l.b16 %v1926
    %v1944 = vunpack.c.l.b16 %v1927
    %v1945 = vunpack.c.l.b16 %v1928
    %v1946 = vunpack.c.l.b16 %v1929
    %v1947 = vunpack.c.l.b16 %v1930
    %v1948 = vunpack.c.l.b16 %v1931
    %v1949 = vunpack.c.l.b16 %v1932
    %v1950 = vpack.c.b16 %v1943, %v1942
    %v1951 = vpack.c.b16 %v1945, %v1944
    %v1952 = vpack.c.b16 %v1947, %v1946
    %v1953 = vpack.c.b16 %v1949, %v1948
    %vm1958 = vcmask 523264
    %v1960 = vsel %vm1958, %v1924, 0
    %1962 = vmatpush.bf16.msra.mxu0 0
    %1963 = vmatpush.bf16.msra.mxu0 0
    %1964 = vmatpush.bf16.msra.mxu0 0
    %1965 = vmatpush.bf16.msra.mxu0 0
    %1966 = vmatpush.bf16.msra.mxu0 %v1953
    %1967 = vmatpush.bf16.msra.mxu0 %v1952
    %1968 = vmatpush.bf16.msra.mxu0 %v1951
    %1969 = vmatpush.bf16.msra.mxu0 %v1950
    %1970 = vmatmul.bf16.gmra.mxu0 %v1960
    %v1971 = vpop.f32.mrf.mxu0
    %v1972 = vadd.f32 %v1933, %v1971
    %v1973 = vpop.f32.mrf.mxu0
    %1974 = vdwg.mxu0
    %v1975 = vmax.f32 %v1972, 0.0
    %v1976 = vpack.c.bf16 %v1975, %v1975
    %v1977 = vld [vmem:[%s3] sm:$0xf]
    %v1978 = vld [vmem:[%s3 + $0x4] sm:$0xf]
    %v1979 = vld [vmem:[%s3 + $0x8] sm:$0xf]
    %v1980 = vld [vmem:[%s3 + $0xc] sm:$0xf]
    %v1981 = vld [vmem:[%s3 + $0x10] sm:$0xf]
    %v1982 = vld [vmem:[%s3 + $0x14] sm:$0xf]
    %v1983 = vld [vmem:[%s3 + $0x18] sm:$0xf]
    %v1984 = vld [vmem:[%s3 + $0x1c] sm:$0xf]
    %v1985 = vld [vmem:[%s3 + $0x20] sm:$0xf]
    %v1986 = vld [vmem:[%s3 + $0x24] sm:$0xf]
    %v1987 = vld [vmem:[%s3 + $0x28] sm:$0xf]
    %v1988 = vld [vmem:[%s3 + $0x2c] sm:$0xf]
    %v1989 = vld [vmem:[%s3 + $0x30] sm:$0xf]
    %v1990 = vld [vmem:[%s3 + $0x34] sm:$0xf]
    %v1991 = vld [vmem:[%s3 + $0x38] sm:$0xf]
    %v1992 = vld [vmem:[%s3 + $0x3c] sm:$0xf]
    %v1993 = vperm.slane %v25, 2
    %v2010 = vunpack.c.l.b16 %v1977
    %v2011 = vunpack.c.l.b16 %v1978
    %v2012 = vunpack.c.l.b16 %v1979
    %v2013 = vunpack.c.l.b16 %v1980
    %v2014 = vunpack.c.l.b16 %v1981
    %v2015 = vunpack.c.l.b16 %v1982
    %v2016 = vunpack.c.l.b16 %v1983
    %v2017 = vunpack.c.l.b16 %v1984
    %v2018 = vunpack.c.l.b16 %v1985
    %v2019 = vunpack.c.l.b16 %v1986
    %v2020 = vunpack.c.l.b16 %v1987
    %v2021 = vunpack.c.l.b16 %v1988
    %v2022 = vunpack.c.l.b16 %v1989
    %v2023 = vunpack.c.l.b16 %v1990
    %v2024 = vunpack.c.l.b16 %v1991
    %v2025 = vunpack.c.l.b16 %v1992
    %v2026 = vpack.c.b16 %v2011, %v2010
    %v2027 = vpack.c.b16 %v2013, %v2012
    %v2028 = vpack.c.b16 %v2015, %v2014
    %v2029 = vpack.c.b16 %v2017, %v2016
    %v2030 = vpack.c.b16 %v2019, %v2018
    %v2031 = vpack.c.b16 %v2021, %v2020
    %v2032 = vpack.c.b16 %v2023, %v2022
    %v2033 = vpack.c.b16 %v2025, %v2024
    %2042 = vmatpush.bf16.msra.mxu0 %v2033
    %2043 = vmatpush.bf16.msra.mxu0 %v2032
    %2044 = vmatpush.bf16.msra.mxu0 %v2031
    %2045 = vmatpush.bf16.msra.mxu0 %v2030
    %2046 = vmatpush.bf16.msra.mxu0 %v2029
    %2047 = vmatpush.bf16.msra.mxu0 %v2028
    %2048 = vmatpush.bf16.msra.mxu0 %v2027
    %2049 = vmatpush.bf16.msra.mxu0 %v2026
    %2050 = vmatmul.bf16.gmra.mxu0 %v1976
    %v2051 = vpop.f32.mrf.mxu0
    %v2052 = vadd.f32 %v1993, %v2051
    %v2053 = vpop.f32.mrf.mxu0
    %2054 = vdwg.mxu0
    %v2055 = vmax.f32 %v2052, 0.0
    %v2056 = vpack.c.bf16 %v2055, %v2055
    %v2057 = vld [vmem:[%s4] sm:$0xf]
    %v2058 = vld [vmem:[%s4 + $0x4] sm:$0xf]
    %v2059 = vld [vmem:[%s4 + $0x8] sm:$0xf]
    %v2060 = vld [vmem:[%s4 + $0xc] sm:$0xf]
    %v2061 = vld [vmem:[%s4 + $0x10] sm:$0xf]
    %v2062 = vld [vmem:[%s4 + $0x14] sm:$0xf]
    %v2063 = vld [vmem:[%s4 + $0x18] sm:$0xf]
    %v2064 = vld [vmem:[%s4 + $0x1c] sm:$0xf]
    %v2065 = vld [vmem:[%s4 + $0x20] sm:$0xf]
    %v2066 = vld [vmem:[%s4 + $0x24] sm:$0xf]
    %v2067 = vld [vmem:[%s4 + $0x28] sm:$0xf]
    %v2068 = vld [vmem:[%s4 + $0x2c] sm:$0xf]
    %v2069 = vld [vmem:[%s4 + $0x30] sm:$0xf]
    %v2070 = vld [vmem:[%s4 + $0x34] sm:$0xf]
    %v2071 = vld [vmem:[%s4 + $0x38] sm:$0xf]
    %v2072 = vld [vmem:[%s4 + $0x3c] sm:$0xf]
    %v2073 = vperm.slane %v25, 3
    %v2090 = vunpack.c.l.b16 %v2057
    %v2091 = vunpack.c.l.b16 %v2058
    %v2092 = vunpack.c.l.b16 %v2059
    %v2093 = vunpack.c.l.b16 %v2060
    %v2094 = vunpack.c.l.b16 %v2061
    %v2095 = vunpack.c.l.b16 %v2062
    %v2096 = vunpack.c.l.b16 %v2063
    %v2097 = vunpack.c.l.b16 %v2064
    %v2098 = vunpack.c.l.b16 %v2065
    %v2099 = vunpack.c.l.b16 %v2066
    %v2100 = vunpack.c.l.b16 %v2067
    %v2101 = vunpack.c.l.b16 %v2068
    %v2102 = vunpack.c.l.b16 %v2069
    %v2103 = vunpack.c.l.b16 %v2070
    %v2104 = vunpack.c.l.b16 %v2071
    %v2105 = vunpack.c.l.b16 %v2072
    %v2106 = vpack.c.b16 %v2091, %v2090
    %v2107 = vpack.c.b16 %v2093, %v2092
    %v2108 = vpack.c.b16 %v2095, %v2094
    %v2109 = vpack.c.b16 %v2097, %v2096
    %v2110 = vpack.c.b16 %v2099, %v2098
    %v2111 = vpack.c.b16 %v2101, %v2100
    %v2112 = vpack.c.b16 %v2103, %v2102
    %v2113 = vpack.c.b16 %v2105, %v2104
    %2122 = vmatpush.bf16.msra.mxu0 %v2113
    %2123 = vmatpush.bf16.msra.mxu0 %v2112
    %2124 = vmatpush.bf16.msra.mxu0 %v2111
    %2125 = vmatpush.bf16.msra.mxu0 %v2110
    %2126 = vmatpush.bf16.msra.mxu0 %v2109
    %2127 = vmatpush.bf16.msra.mxu0 %v2108
    %2128 = vmatpush.bf16.msra.mxu0 %v2107
    %2129 = vmatpush.bf16.msra.mxu0 %v2106
    %2130 = vmatmul.bf16.gmra.mxu0 %v2056
    %v2131 = vpop.f32.mrf.mxu0
    %v2132 = vadd.f32 %v2073, %v2131
    %v2133 = vpop.f32.mrf.mxu0
    %2134 = vdwg.mxu0
    %2135 = vst [vmem:[#allocation2] sm:$0xff] %v2132
    // Predicated region
    $region26: #{tpu_custom_call.1} parent=1 // pred_check
      _
    $region27: #{tpu_custom_call.1} parent=1 // pred_check_branch
      %2137 = sbr.rel (0) target = $region29
    $region28: #{tpu_custom_call.1} parent=1 // pred_region
      %2139 = vsyncadd [#allocation3], 0
      %s2141 = sshll.u32 [#allocation2], 4
      %s2142 = int_to_ptr.vmem [resolvable:$true] %s2141
      %s2143 = sshll.u32 %s6, 4
      %s2144 = int_to_ptr.hbm [resolvable:$true] %s2143
      %2146 = dma.vmem_to_hbm [thread:$0]  %s2142, 128, %s2144, [#allocation3]
    $region29: #{tpu_custom_call.1} parent=1 // pred_fallthru
      _
    // Predicated region
    $region30: #{tpu_custom_call.1} parent=1 // pred_check
      _
    $region31: #{tpu_custom_call.1} parent=1 // pred_check_branch
      %2148 = sbr.rel (0) target = $region33
    $region32: #{tpu_custom_call.1} parent=1 // pred_region
      %2150 = dma.done [#allocation3], 128
    $region33: #{tpu_custom_call.1} parent=1 // pred_fallthru
      _
    %2151 = vsyncpa [#allocation3], 1

</llo_original>
